<compile_context>
chip_gen: v5e
topology: v5e:2x2
jax: 0.10.0
libtpu: 0.0.40
codegen_flags: <defaults>
</compile_context>

<pallas_src>
import functools

import jax
import jax.numpy as jnp
from jax import lax
from jax.experimental import pallas as pl
from jax.experimental.pallas import tpu as pltpu


# ------------------------------ tiling helpers ------------------------------

def _pick_tile(n, candidates=(256, 512, 128)):
    """Largest preferred tile that divides n; else use the full extent."""
    for c in candidates:
        if n % c == 0:
            return c
    return n


# ----------------------------- Pallas kernels ------------------------------

def _linear_kernel(x_ref, w_ref, b_ref, o_ref, *, activation):
    # bf16 MXU matmul, f32 accumulation, bias (+ optional relu) fused.
    y = jnp.dot(x_ref[...].astype(jnp.bfloat16), w_ref[...],
                preferred_element_type=jnp.float32)
    y = y + b_ref[...]
    if activation == "relu":
        y = jnp.maximum(y, 0.0)
    o_ref[...] = y.astype(o_ref.dtype)


def fused_linear(x, w, b, activation=None, out_dtype=jnp.float32):
    """y = act(x @ w + b).  x: (M, K) f32/bf16, w: (K, N) bf16, b: (N,) f32."""
    M, K = x.shape
    N = w.shape[1]
    tm = _pick_tile(M)
    tn = _pick_tile(N, candidates=(1024, 512, 256)) if N > 1024 else N
    return pl.pallas_call(
        functools.partial(_linear_kernel, activation=activation),
        out_shape=jax.ShapeDtypeStruct((M, N), out_dtype),
        grid=(M // tm, N // tn),
        in_specs=[
            pl.BlockSpec((tm, K), lambda i, j: (i, 0)),
            pl.BlockSpec((K, tn), lambda i, j: (0, j)),
            pl.BlockSpec((1, tn), lambda i, j: (0, j)),
        ],
        out_specs=pl.BlockSpec((tm, tn), lambda i, j: (i, j)),
        compiler_params=pltpu.CompilerParams(
            dimension_semantics=("parallel", "parallel")),
    )(x, w, b.reshape(1, N))


def _attn_kernel(qkv_ref, bias_ref, o_ref, *, n_heads, d_model):
    # Blocks: qkv (1, S, 3D) bf16, bias (1, 1, S) f32, out (1, S, D) bf16.
    # All heads of one batch element in one grid step; lane-dense output.
    dh = d_model // n_heads
    qkv = qkv_ref[0]              # (S, 3D) bf16; 1/sqrt(dh) already folded in wq
    bias = bias_ref[0]            # (1, S) additive key-padding bias (0 or -1e30)
    outs = []
    for h in range(n_heads):      # static unroll over heads
        q = qkv[:, h * dh:(h + 1) * dh]                                  # (S, Dh)
        k = qkv[:, d_model + h * dh:d_model + (h + 1) * dh]              # (S, Dh)
        v = qkv[:, 2 * d_model + h * dh:2 * d_model + (h + 1) * dh]      # (S, Dh)
        # q @ k^T via dot_general contracting Dh directly (no explicit transpose).
        s = lax.dot_general(q, k, (((1,), (1,)), ((), ())),
                            preferred_element_type=jnp.float32)          # (S, S)
        s = s + bias
        m = jnp.max(s, axis=-1, keepdims=True)
        p = jnp.exp(s - m)
        p = p / jnp.sum(p, axis=-1, keepdims=True)
        outs.append(jnp.dot(p.astype(v.dtype), v,
                            preferred_element_type=jnp.float32))         # (S, Dh)
    o_ref[0] = jnp.concatenate(outs, axis=-1).astype(o_ref.dtype)         # (S, D)


def mha_attention(qkv, bias, n_heads, d_model):
    """qkv: (B, S, 3D) bf16; bias: (B, 1, S) f32 additive. Returns (B, S, D) bf16."""
    B, S, _ = qkv.shape
    # TODO(synk): for S beyond a few hundred, switch to an online-softmax (flash)
    # form tiled over the key axis instead of materializing the full (S, S) scores.
    return pl.pallas_call(
        functools.partial(_attn_kernel, n_heads=n_heads, d_model=d_model),
        out_shape=jax.ShapeDtypeStruct((B, S, d_model), jnp.bfloat16),
        grid=(B,),
        in_specs=[
            pl.BlockSpec((1, S, 3 * d_model), lambda b: (b, 0, 0)),
            pl.BlockSpec((1, 1, S), lambda b: (b, 0, 0)),
        ],
        out_specs=pl.BlockSpec((1, S, d_model), lambda b: (b, 0, 0)),
        compiler_params=pltpu.CompilerParams(dimension_semantics=("parallel",)),
    )(qkv, bias)


def _proj_res_ln_kernel(x_ref, w_ref, b_ref, res_ref, g_ref, beta_ref, o_ref):
    # LayerNorm((x @ w + b) + residual), PyTorch-style (eps=1e-5, biased var).
    y = jnp.dot(x_ref[...].astype(jnp.bfloat16), w_ref[...],
                preferred_element_type=jnp.float32)
    y = y + b_ref[...] + res_ref[...]
    mu = jnp.mean(y, axis=-1, keepdims=True)
    var = jnp.mean(jnp.square(y - mu), axis=-1, keepdims=True)
    o_ref[...] = ((y - mu) * lax.rsqrt(var + 1e-5) * g_ref[...]
                  + beta_ref[...]).astype(o_ref.dtype)


def proj_residual_ln(x, w, b, res, g, beta):
    """LayerNorm(x @ w + b + res).  x: (M, K) bf16, w: (K, D) bf16, res: (M, D) f32."""
    M, D = res.shape
    K = x.shape[1]
    tm = _pick_tile(M)
    return pl.pallas_call(
        _proj_res_ln_kernel,
        out_shape=jax.ShapeDtypeStruct((M, D), jnp.float32),
        grid=(M // tm,),
        in_specs=[
            pl.BlockSpec((tm, K), lambda i: (i, 0)),
            pl.BlockSpec((K, D), lambda i: (0, 0)),
            pl.BlockSpec((1, D), lambda i: (0, 0)),
            pl.BlockSpec((tm, D), lambda i: (i, 0)),
            pl.BlockSpec((1, D), lambda i: (0, 0)),
            pl.BlockSpec((1, D), lambda i: (0, 0)),
        ],
        out_specs=pl.BlockSpec((tm, D), lambda i: (i, 0)),
        compiler_params=pltpu.CompilerParams(dimension_semantics=("parallel",)),
    )(x, w, b.reshape(1, D), res, g.reshape(1, D), beta.reshape(1, D))


def _ffn_res_ln_kernel(h_ref, w1_ref, b1_ref, w2_ref, b2_ref, g_ref, beta_ref, o_ref):
    # LayerNorm(relu(h @ w1 + b1) @ w2 + b2 + h), all in one VMEM pass.
    h = h_ref[...]                                                   # (tm, D) f32
    z = jnp.dot(h.astype(jnp.bfloat16), w1_ref[...],
                preferred_element_type=jnp.float32) + b1_ref[...]
    z = jnp.maximum(z, 0.0)
    y = jnp.dot(z.astype(jnp.bfloat16), w2_ref[...],
                preferred_element_type=jnp.float32) + b2_ref[...]
    y = y + h
    mu = jnp.mean(y, axis=-1, keepdims=True)
    var = jnp.mean(jnp.square(y - mu), axis=-1, keepdims=True)
    o_ref[...] = ((y - mu) * lax.rsqrt(var + 1e-5) * g_ref[...]
                  + beta_ref[...]).astype(o_ref.dtype)


def ffn_residual_ln(h, w1, b1, w2, b2, g, beta):
    """Fused FFN sub-block.  h: (M, D) f32, w1: (D, F) bf16, w2: (F, D) bf16."""
    M, D = h.shape
    F = w1.shape[1]
    tm = _pick_tile(M)
    # TODO(synk): for very large d_ff on v7x (64 MiB VMEM), tile the F dimension
    # so resident bf16 weight panels stay under ~32 MiB scoped VMEM.
    return pl.pallas_call(
        _ffn_res_ln_kernel,
        out_shape=jax.ShapeDtypeStruct((M, D), jnp.float32),
        grid=(M // tm,),
        in_specs=[
            pl.BlockSpec((tm, D), lambda i: (i, 0)),
            pl.BlockSpec((D, F), lambda i: (0, 0)),
            pl.BlockSpec((1, F), lambda i: (0, 0)),
            pl.BlockSpec((F, D), lambda i: (0, 0)),
            pl.BlockSpec((1, D), lambda i: (0, 0)),
            pl.BlockSpec((1, D), lambda i: (0, 0)),
            pl.BlockSpec((1, D), lambda i: (0, 0)),
        ],
        out_specs=pl.BlockSpec((tm, D), lambda i: (i, 0)),
        compiler_params=pltpu.CompilerParams(dimension_semantics=("parallel",)),
    )(h, w1, b1.reshape(1, F), w2, b2.reshape(1, D),
      g.reshape(1, D), beta.reshape(1, D))


def _ln_kernel(x_ref, g_ref, b_ref, o_ref):
    x = x_ref[...]
    mu = jnp.mean(x, axis=-1, keepdims=True)
    var = jnp.mean(jnp.square(x - mu), axis=-1, keepdims=True)
    o_ref[...] = ((x - mu) * lax.rsqrt(var + 1e-5) * g_ref[...]
                  + b_ref[...]).astype(o_ref.dtype)


def layernorm(x, g, b):
    """LayerNorm over the last dim (final encoder norm; no dummy residual)."""
    M, D = x.shape
    tm = _pick_tile(M)
    return pl.pallas_call(
        _ln_kernel,
        out_shape=jax.ShapeDtypeStruct((M, D), jnp.float32),
        grid=(M // tm,),
        in_specs=[
            pl.BlockSpec((tm, D), lambda i: (i, 0)),
            pl.BlockSpec((1, D), lambda i: (0, 0)),
            pl.BlockSpec((1, D), lambda i: (0, 0)),
        ],
        out_specs=pl.BlockSpec((tm, D), lambda i: (i, 0)),
        compiler_params=pltpu.CompilerParams(dimension_semantics=("parallel",)),
    )(x, g.reshape(1, D), b.reshape(1, D))


# --------------------------- parameters & forward ---------------------------

def _xavier_uniform(key, shape):
    limit = (6.0 / (shape[0] + shape[1])) ** 0.5
    return jax.random.uniform(key, shape, jnp.float32, -limit, limit)


def init_params(key, d_input, d_model, d_ff, n_layers):
    keys = jax.random.split(key, 1 + n_layers)
    params = {
        "emb_w": _xavier_uniform(keys[0], (d_input, d_model)),
        "emb_b": jnp.zeros((d_model,), jnp.float32),
        "lnf_g": jnp.ones((d_model,), jnp.float32),
        "lnf_b": jnp.zeros((d_model,), jnp.float32),
        "layers": [],
    }
    for i in range(n_layers):
        lk = jax.random.split(keys[1 + i], 6)
        params["layers"].append({
            "wq": _xavier_uniform(lk[0], (d_model, d_model)),
            "wk": _xavier_uniform(lk[1], (d_model, d_model)),
            "wv": _xavier_uniform(lk[2], (d_model, d_model)),
            "bq": jnp.zeros((d_model,), jnp.float32),
            "bk": jnp.zeros((d_model,), jnp.float32),
            "bv": jnp.zeros((d_model,), jnp.float32),
            "wo": _xavier_uniform(lk[3], (d_model, d_model)),
            "bo": jnp.zeros((d_model,), jnp.float32),
            "w1": _xavier_uniform(lk[4], (d_model, d_ff)),
            "b1": jnp.zeros((d_ff,), jnp.float32),
            "w2": _xavier_uniform(lk[5], (d_ff, d_model)),
            "b2": jnp.zeros((d_model,), jnp.float32),
            "ln1_g": jnp.ones((d_model,), jnp.float32),
            "ln1_b": jnp.zeros((d_model,), jnp.float32),
            "ln2_g": jnp.ones((d_model,), jnp.float32),
            "ln2_b": jnp.zeros((d_model,), jnp.float32),
        })
    return params


def prepare_params(params, n_heads):
    """Fuse wq|wk|wv (with 1/sqrt(Dh) folded into q), cast weights to bf16."""
    d_model = params["emb_w"].shape[1]
    dh = d_model // n_heads
    scale = dh ** -0.5
    prep = {
        "emb_w": params["emb_w"].astype(jnp.bfloat16),
        "emb_b": params["emb_b"],
        "lnf_g": params["lnf_g"],
        "lnf_b": params["lnf_b"],
        "layers": [],
    }
    for lyr in params["layers"]:
        wqkv = jnp.concatenate([lyr["wq"] * scale, lyr["wk"], lyr["wv"]], axis=1)
        bqkv = jnp.concatenate([lyr["bq"] * scale, lyr["bk"], lyr["bv"]])
        prep["layers"].append({
            "wqkv": wqkv.astype(jnp.bfloat16),
            "bqkv": bqkv,
            "wo": lyr["wo"].astype(jnp.bfloat16), "bo": lyr["bo"],
            "w1": lyr["w1"].astype(jnp.bfloat16), "b1": lyr["b1"],
            "w2": lyr["w2"].astype(jnp.bfloat16), "b2": lyr["b2"],
            "ln1_g": lyr["ln1_g"], "ln1_b": lyr["ln1_b"],
            "ln2_g": lyr["ln2_g"], "ln2_b": lyr["ln2_b"],
        })
    return prep


def encoder_forward(prep, inputs, mask_valid, n_heads):
    """inputs: (B, S, d_input); mask_valid: (B, S) bool with True = real token.

    Returns (memory, mask_padding_x) mirroring EncoderState:
      memory: (S, B, d_model) f32, mask_padding_x: (B, S) bool (True = padding).
    """
    B, S, _ = inputs.shape
    d_model = prep["emb_w"].shape[1]
    mask_padding = jnp.logical_not(mask_valid)                 # ~inputs[1]
    # key_padding_mask: masked-key scores -> -inf before softmax
    bias = jnp.where(mask_padding, -1e30, 0.0).astype(jnp.float32).reshape(B, 1, S)

    # embedding Linear(d_input, d_model); f32 residual stream
    x = inputs.astype(jnp.float32).reshape(B * S, -1)          # inputs[0].float()
    h = fused_linear(x, prep["emb_w"], prep["emb_b"], out_dtype=jnp.float32)

    # TODO(synk): dropout layers are stochastic at train time; eval-mode identity here.
    for lyr in prep["layers"]:
        # ---- self-attention sub-block (post-norm) ----
        qkv = fused_linear(h, lyr["wqkv"], lyr["bqkv"], out_dtype=jnp.bfloat16)
        attn = mha_attention(qkv.reshape(B, S, 3 * d_model), bias, n_heads, d_model)
        h = proj_residual_ln(attn.reshape(B * S, d_model), lyr["wo"], lyr["bo"],
                             h, lyr["ln1_g"], lyr["ln1_b"])

        # ---- feed-forward sub-block (post-norm, relu), fully fused ----
        h = ffn_residual_ln(h, lyr["w1"], lyr["b1"], lyr["w2"], lyr["b2"],
                            lyr["ln2_g"], lyr["ln2_b"])

    # final encoder LayerNorm
    h = layernorm(h, prep["lnf_g"], prep["lnf_b"])

    memory = h.reshape(B, S, d_model).transpose(1, 0, 2)        # (S, B, D) seq-first
    return memory, mask_padding


# ---------------------------------- main ------------------------------------

if __name__ == "__main__":
    B, S = 2, 8
    d_input, d_model, d_ff, n_heads, n_layers = 16, 32, 64, 4, 2

    raw_params = init_params(jax.random.PRNGKey(0), d_input, d_model, d_ff, n_layers)
    prep = prepare_params(raw_params, n_heads)

    x = jax.random.normal(jax.random.PRNGKey(1), (B, S, d_input), dtype=jnp.float32)
    lengths = jnp.array([8, 5], dtype=jnp.int32)
    mask_valid = jnp.arange(S)[None, :] < lengths[:, None]      # True = real token

    fwd = jax.jit(functools.partial(encoder_forward, n_heads=n_heads))
    memory, mask_padding = fwd(prep, x, mask_valid)
    memory = jax.block_until_ready(memory)
    mask_padding = jax.block_until_ready(mask_padding)

    assert memory.shape == (S, B, d_model)
    assert memory.dtype == jnp.float32
    assert mask_padding.shape == (B, S)
    assert bool(jnp.all(jnp.isfinite(memory)))
    print("KERNEL_OK")
</pallas_src>

<mosaic_0001>
module attributes {stable_mosaic.version = 11 : i64} {
  func.func @_linear_kernel(%arg0: i32, %arg1: i32, %arg2: memref<16x16xf32, #tpu.memory_space<vmem>>, %arg3: memref<16x32xbf16, #tpu.memory_space<vmem>>, %arg4: memref<1x32xf32, #tpu.memory_space<vmem>>, %arg5: memref<16x32xf32, #tpu.memory_space<vmem>>) attributes {dimension_semantics = [#tpu.dimension_semantics<parallel>, #tpu.dimension_semantics<parallel>], iteration_bounds = array<i64: 1, 1>, scalar_prefetch = 0 : i64, scratch_operands = 0 : i64, tpu.core_type = #tpu.core_type<tc>, window_params = [{transform_indices = @transform_0, window_bounds = array<i64: 16, 16>}, {transform_indices = @transform_1, window_bounds = array<i64: 16, 32>}, {transform_indices = @transform_2, window_bounds = array<i64: 1, 32>}, {transform_indices = @transform_3, window_bounds = array<i64: 16, 32>}]} {
    %c0 = arith.constant 0 : index
    %c0_0 = arith.constant 0 : index
    %0 = vector.load %arg2[%c0, %c0_0] : memref<16x16xf32, #tpu.memory_space<vmem>>, vector<16x16xf32>
    %1 = arith.truncf %0 : vector<16x16xf32> to vector<16x16xbf16>
    %c0_1 = arith.constant 0 : index
    %c0_2 = arith.constant 0 : index
    %2 = vector.load %arg3[%c0_1, %c0_2] : memref<16x32xbf16, #tpu.memory_space<vmem>>, vector<16x32xbf16>
    %cst = arith.constant dense<0.000000e+00> : vector<16x32xf32>
    %3 = tpu.matmul %1, %2, %cst {dimension_numbers = #tpu.dot_dimension_numbers<[1], [0], [0], [1], [0, 0, 1, 1], [], []>} : vector<16x16xbf16>, vector<16x32xbf16>, vector<16x32xf32> -> vector<16x32xf32>
    %c0_3 = arith.constant 0 : index
    %c0_4 = arith.constant 0 : index
    %4 = vector.load %arg4[%c0_3, %c0_4] : memref<1x32xf32, #tpu.memory_space<vmem>>, vector<1x32xf32>
    %5 = vector.broadcast %4 : vector<1x32xf32> to vector<16x32xf32>
    %6 = arith.addf %3, %5 : vector<16x32xf32>
    %c0_5 = arith.constant 0 : index
    %c0_6 = arith.constant 0 : index
    %7 = vector.load %arg5[%c0_5, %c0_6] : memref<16x32xf32, #tpu.memory_space<vmem>>, vector<16x32xf32>
    tpu.vector_store %arg5[%c0_5, %c0_6], %6 {strides = array<i32>} : memref<16x32xf32, #tpu.memory_space<vmem>>, vector<16x32xf32>,
    return
  }
  func.func @transform_0(%arg0: i32, %arg1: i32) -> (i32, i32) {
    %c0_i32 = arith.constant 0 : i32
    %c0_i32_0 = arith.constant 0 : i32
    return %arg0, %c0_i32 : i32, i32
  }
  func.func @transform_1(%arg0: i32, %arg1: i32) -> (i32, i32) {
    %c0_i32 = arith.constant 0 : i32
    %c0_i32_0 = arith.constant 0 : i32
    return %c0_i32, %arg1 : i32, i32
  }
  func.func @transform_2(%arg0: i32, %arg1: i32) -> (i32, i32) {
    %c0_i32 = arith.constant 0 : i32
    %c0_i32_0 = arith.constant 0 : i32
    return %c0_i32, %arg1 : i32, i32
  }
  func.func @transform_3(%arg0: i32, %arg1: i32) -> (i32, i32) {
    %c0_i32 = arith.constant 0 : i32
    return %arg0, %arg1 : i32, i32
  }
}

module attributes {stable_mosaic.version = 11 : i64} {
  func.func @_linear_kernel(%arg0: i32, %arg1: i32, %arg2: memref<16x32xf32, #tpu.memory_space<vmem>>, %arg3: memref<32x96xbf16, #tpu.memory_space<vmem>>, %arg4: memref<1x96xf32, #tpu.memory_space<vmem>>, %arg5: memref<16x96xbf16, #tpu.memory_space<vmem>>) attributes {dimension_semantics = [#tpu.dimension_semantics<parallel>, #tpu.dimension_semantics<parallel>], iteration_bounds = array<i64: 1, 1>, scalar_prefetch = 0 : i64, scratch_operands = 0 : i64, tpu.core_type = #tpu.core_type<tc>, window_params = [{transform_indices = @transform_0, window_bounds = array<i64: 16, 32>}, {transform_indices = @transform_1, window_bounds = array<i64: 32, 96>}, {transform_indices = @transform_2, window_bounds = array<i64: 1, 96>}, {transform_indices = @transform_3, window_bounds = array<i64: 16, 96>}]} {
    %c0 = arith.constant 0 : index
    %c0_0 = arith.constant 0 : index
    %0 = vector.load %arg2[%c0, %c0_0] : memref<16x32xf32, #tpu.memory_space<vmem>>, vector<16x32xf32>
    %1 = arith.truncf %0 : vector<16x32xf32> to vector<16x32xbf16>
    %c0_1 = arith.constant 0 : index
    %c0_2 = arith.constant 0 : index
    %2 = vector.load %arg3[%c0_1, %c0_2] : memref<32x96xbf16, #tpu.memory_space<vmem>>, vector<32x96xbf16>
    %cst = arith.constant dense<0.000000e+00> : vector<16x96xf32>
    %3 = tpu.matmul %1, %2, %cst {dimension_numbers = #tpu.dot_dimension_numbers<[1], [0], [0], [1], [0, 0, 1, 1], [], []>} : vector<16x32xbf16>, vector<32x96xbf16>, vector<16x96xf32> -> vector<16x96xf32>
    %c0_3 = arith.constant 0 : index
    %c0_4 = arith.constant 0 : index
    %4 = vector.load %arg4[%c0_3, %c0_4] : memref<1x96xf32, #tpu.memory_space<vmem>>, vector<1x96xf32>
    %5 = vector.broadcast %4 : vector<1x96xf32> to vector<16x96xf32>
    %6 = arith.addf %3, %5 : vector<16x96xf32>
    %7 = arith.truncf %6 : vector<16x96xf32> to vector<16x96xbf16>
    %c0_5 = arith.constant 0 : index
    %c0_6 = arith.constant 0 : index
    %8 = vector.load %arg5[%c0_5, %c0_6] : memref<16x96xbf16, #tpu.memory_space<vmem>>, vector<16x96xbf16>
    tpu.vector_store %arg5[%c0_5, %c0_6], %7 {strides = array<i32>} : memref<16x96xbf16, #tpu.memory_space<vmem>>, vector<16x96xbf16>,
    return
  }
  func.func @transform_0(%arg0: i32, %arg1: i32) -> (i32, i32) {
    %c0_i32 = arith.constant 0 : i32
    %c0_i32_0 = arith.constant 0 : i32
    return %arg0, %c0_i32 : i32, i32
  }
  func.func @transform_1(%arg0: i32, %arg1: i32) -> (i32, i32) {
    %c0_i32 = arith.constant 0 : i32
    %c0_i32_0 = arith.constant 0 : i32
    return %c0_i32, %arg1 : i32, i32
  }
  func.func @transform_2(%arg0: i32, %arg1: i32) -> (i32, i32) {
    %c0_i32 = arith.constant 0 : i32
    %c0_i32_0 = arith.constant 0 : i32
    return %c0_i32, %arg1 : i32, i32
  }
  func.func @transform_3(%arg0: i32, %arg1: i32) -> (i32, i32) {
    %c0_i32 = arith.constant 0 : i32
    return %arg0, %arg1 : i32, i32
  }
}

module attributes {stable_mosaic.version = 11 : i64} {
  func.func @_attn_kernel(%arg0: i32, %arg1: memref<1x8x96xbf16, #tpu.memory_space<vmem>>, %arg2: memref<1x1x8xf32, #tpu.memory_space<vmem>>, %arg3: memref<1x8x32xbf16, #tpu.memory_space<vmem>>) attributes {dimension_semantics = [#tpu.dimension_semantics<parallel>], iteration_bounds = array<i64: 2>, scalar_prefetch = 0 : i64, scratch_operands = 0 : i64, tpu.core_type = #tpu.core_type<tc>, window_params = [{transform_indices = @transform_0, window_bounds = array<i64: 1, 8, 96>}, {transform_indices = @transform_1, window_bounds = array<i64: 1, 1, 8>}, {transform_indices = @transform_2, window_bounds = array<i64: 1, 8, 32>}]} {
    %c0 = arith.constant 0 : index
    %c0_0 = arith.constant 0 : index
    %c0_1 = arith.constant 0 : index
    %0 = vector.load %arg1[%c0, %c0_0, %c0_1] : memref<1x8x96xbf16, #tpu.memory_space<vmem>>, vector<1x8x96xbf16>
    %1 = vector.shape_cast %0 : vector<1x8x96xbf16> to vector<8x96xbf16>
    %c0_2 = arith.constant 0 : index
    %c0_3 = arith.constant 0 : index
    %c0_4 = arith.constant 0 : index
    %2 = vector.load %arg2[%c0_2, %c0_3, %c0_4] : memref<1x1x8xf32, #tpu.memory_space<vmem>>, vector<1x1x8xf32>
    %3 = vector.shape_cast %2 : vector<1x1x8xf32> to vector<1x8xf32>
    %4 = vector.extract_strided_slice %1 {offsets = [0, 0], sizes = [8, 8], strides = [1, 1]} : vector<8x96xbf16> to vector<8x8xbf16>
    %5 = vector.extract_strided_slice %1 {offsets = [0, 32], sizes = [8, 8], strides = [1, 1]} : vector<8x96xbf16> to vector<8x8xbf16>
    %6 = vector.extract_strided_slice %1 {offsets = [0, 64], sizes = [8, 8], strides = [1, 1]} : vector<8x96xbf16> to vector<8x8xbf16>
    %cst = arith.constant dense<0.000000e+00> : vector<8x8xf32>
    %7 = tpu.matmul %4, %5, %cst {dimension_numbers = #tpu.dot_dimension_numbers<[1], [1], [0], [0], [0, 0, 1, 0], [], []>} : vector<8x8xbf16>, vector<8x8xbf16>, vector<8x8xf32> -> vector<8x8xf32>
    %8 = vector.broadcast %3 : vector<1x8xf32> to vector<8x8xf32>
    %9 = arith.addf %7, %8 : vector<8x8xf32>
    %cst_5 = arith.constant dense<0xFF800000> : vector<8xf32>
    %10 = vector.multi_reduction <maximumf>, %9, %cst_5 [1] : vector<8x8xf32> to vector<8xf32>
    %11 = vector.shape_cast %10 : vector<8xf32> to vector<8x1xf32>
    %12 = vector.broadcast %11 : vector<8x1xf32> to vector<8x8xf32>
    %13 = arith.subf %9, %12 : vector<8x8xf32>
    %14 = math.exp %13 : vector<8x8xf32>
    %cst_6 = arith.constant dense<0.000000e+00> : vector<8xf32>
    %15 = vector.multi_reduction <add>, %14, %cst_6 [1] : vector<8x8xf32> to vector<8xf32>
    %16 = vector.shape_cast %15 : vector<8xf32> to vector<8x1xf32>
    %17 = vector.broadcast %16 : vector<8x1xf32> to vector<8x8xf32>
    %18 = arith.divf %14, %17 : vector<8x8xf32>
    %19 = arith.truncf %18 : vector<8x8xf32> to vector<8x8xbf16>
    %cst_7 = arith.constant dense<0.000000e+00> : vector<8x8xf32>
    %20 = tpu.matmul %19, %6, %cst_7 {dimension_numbers = #tpu.dot_dimension_numbers<[1], [0], [0], [1], [0, 0, 1, 1], [], []>} : vector<8x8xbf16>, vector<8x8xbf16>, vector<8x8xf32> -> vector<8x8xf32>
    %21 = vector.extract_strided_slice %1 {offsets = [0, 8], sizes = [8, 8], strides = [1, 1]} : vector<8x96xbf16> to vector<8x8xbf16>
    %22 = vector.extract_strided_slice %1 {offsets = [0, 40], sizes = [8, 8], strides = [1, 1]} : vector<8x96xbf16> to vector<8x8xbf16>
    %23 = vector.extract_strided_slice %1 {offsets = [0, 72], sizes = [8, 8], strides = [1, 1]} : vector<8x96xbf16> to vector<8x8xbf16>
    %cst_8 = arith.constant dense<0.000000e+00> : vector<8x8xf32>
    %24 = tpu.matmul %21, %22, %cst_8 {dimension_numbers = #tpu.dot_dimension_numbers<[1], [1], [0], [0], [0, 0, 1, 0], [], []>} : vector<8x8xbf16>, vector<8x8xbf16>, vector<8x8xf32> -> vector<8x8xf32>
    %25 = vector.broadcast %3 : vector<1x8xf32> to vector<8x8xf32>
    %26 = arith.addf %24, %25 : vector<8x8xf32>
    %cst_9 = arith.constant dense<0xFF800000> : vector<8xf32>
    %27 = vector.multi_reduction <maximumf>, %26, %cst_9 [1] : vector<8x8xf32> to vector<8xf32>
    %28 = vector.shape_cast %27 : vector<8xf32> to vector<8x1xf32>
    %29 = vector.broadcast %28 : vector<8x1xf32> to vector<8x8xf32>
    %30 = arith.subf %26, %29 : vector<8x8xf32>
    %31 = math.exp %30 : vector<8x8xf32>
    %cst_10 = arith.constant dense<0.000000e+00> : vector<8xf32>
    %32 = vector.multi_reduction <add>, %31, %cst_10 [1] : vector<8x8xf32> to vector<8xf32>
    %33 = vector.shape_cast %32 : vector<8xf32> to vector<8x1xf32>
    %34 = vector.broadcast %33 : vector<8x1xf32> to vector<8x8xf32>
    %35 = arith.divf %31, %34 : vector<8x8xf32>
    %36 = arith.truncf %35 : vector<8x8xf32> to vector<8x8xbf16>
    %cst_11 = arith.constant dense<0.000000e+00> : vector<8x8xf32>
    %37 = tpu.matmul %36, %23, %cst_11 {dimension_numbers = #tpu.dot_dimension_numbers<[1], [0], [0], [1], [0, 0, 1, 1], [], []>} : vector<8x8xbf16>, vector<8x8xbf16>, vector<8x8xf32> -> vector<8x8xf32>
    %38 = vector.extract_strided_slice %1 {offsets = [0, 16], sizes = [8, 8], strides = [1, 1]} : vector<8x96xbf16> to vector<8x8xbf16>
    %39 = vector.extract_strided_slice %1 {offsets = [0, 48], sizes = [8, 8], strides = [1, 1]} : vector<8x96xbf16> to vector<8x8xbf16>
    %40 = vector.extract_strided_slice %1 {offsets = [0, 80], sizes = [8, 8], strides = [1, 1]} : vector<8x96xbf16> to vector<8x8xbf16>
    %cst_12 = arith.constant dense<0.000000e+00> : vector<8x8xf32>
    %41 = tpu.matmul %38, %39, %cst_12 {dimension_numbers = #tpu.dot_dimension_numbers<[1], [1], [0], [0], [0, 0, 1, 0], [], []>} : vector<8x8xbf16>, vector<8x8xbf16>, vector<8x8xf32> -> vector<8x8xf32>
    %42 = vector.broadcast %3 : vector<1x8xf32> to vector<8x8xf32>
    %43 = arith.addf %41, %42 : vector<8x8xf32>
    %cst_13 = arith.constant dense<0xFF800000> : vector<8xf32>
    %44 = vector.multi_reduction <maximumf>, %43, %cst_13 [1] : vector<8x8xf32> to vector<8xf32>
    %45 = vector.shape_cast %44 : vector<8xf32> to vector<8x1xf32>
    %46 = vector.broadcast %45 : vector<8x1xf32> to vector<8x8xf32>
    %47 = arith.subf %43, %46 : vector<8x8xf32>
    %48 = math.exp %47 : vector<8x8xf32>
    %cst_14 = arith.constant dense<0.000000e+00> : vector<8xf32>
    %49 = vector.multi_reduction <add>, %48, %cst_14 [1] : vector<8x8xf32> to vector<8xf32>
    %50 = vector.shape_cast %49 : vector<8xf32> to vector<8x1xf32>
    %51 = vector.broadcast %50 : vector<8x1xf32> to vector<8x8xf32>
    %52 = arith.divf %48, %51 : vector<8x8xf32>
    %53 = arith.truncf %52 : vector<8x8xf32> to vector<8x8xbf16>
    %cst_15 = arith.constant dense<0.000000e+00> : vector<8x8xf32>
    %54 = tpu.matmul %53, %40, %cst_15 {dimension_numbers = #tpu.dot_dimension_numbers<[1], [0], [0], [1], [0, 0, 1, 1], [], []>} : vector<8x8xbf16>, vector<8x8xbf16>, vector<8x8xf32> -> vector<8x8xf32>
    %55 = vector.extract_strided_slice %1 {offsets = [0, 24], sizes = [8, 8], strides = [1, 1]} : vector<8x96xbf16> to vector<8x8xbf16>
    %56 = vector.extract_strided_slice %1 {offsets = [0, 56], sizes = [8, 8], strides = [1, 1]} : vector<8x96xbf16> to vector<8x8xbf16>
    %57 = vector.extract_strided_slice %1 {offsets = [0, 88], sizes = [8, 8], strides = [1, 1]} : vector<8x96xbf16> to vector<8x8xbf16>
    %cst_16 = arith.constant dense<0.000000e+00> : vector<8x8xf32>
    %58 = tpu.matmul %55, %56, %cst_16 {dimension_numbers = #tpu.dot_dimension_numbers<[1], [1], [0], [0], [0, 0, 1, 0], [], []>} : vector<8x8xbf16>, vector<8x8xbf16>, vector<8x8xf32> -> vector<8x8xf32>
    %59 = vector.broadcast %3 : vector<1x8xf32> to vector<8x8xf32>
    %60 = arith.addf %58, %59 : vector<8x8xf32>
    %cst_17 = arith.constant dense<0xFF800000> : vector<8xf32>
    %61 = vector.multi_reduction <maximumf>, %60, %cst_17 [1] : vector<8x8xf32> to vector<8xf32>
    %62 = vector.shape_cast %61 : vector<8xf32> to vector<8x1xf32>
    %63 = vector.broadcast %62 : vector<8x1xf32> to vector<8x8xf32>
    %64 = arith.subf %60, %63 : vector<8x8xf32>
    %65 = math.exp %64 : vector<8x8xf32>
    %cst_18 = arith.constant dense<0.000000e+00> : vector<8xf32>
    %66 = vector.multi_reduction <add>, %65, %cst_18 [1] : vector<8x8xf32> to vector<8xf32>
    %67 = vector.shape_cast %66 : vector<8xf32> to vector<8x1xf32>
    %68 = vector.broadcast %67 : vector<8x1xf32> to vector<8x8xf32>
    %69 = arith.divf %65, %68 : vector<8x8xf32>
    %70 = arith.truncf %69 : vector<8x8xf32> to vector<8x8xbf16>
    %cst_19 = arith.constant dense<0.000000e+00> : vector<8x8xf32>
    %71 = tpu.matmul %70, %57, %cst_19 {dimension_numbers = #tpu.dot_dimension_numbers<[1], [0], [0], [1], [0, 0, 1, 1], [], []>} : vector<8x8xbf16>, vector<8x8xbf16>, vector<8x8xf32> -> vector<8x8xf32>
    %72 = tpu.concatenate %20, %37, %54, %71 in 1 : vector<8x8xf32>, vector<8x8xf32>, vector<8x8xf32>, vector<8x8xf32> -> vector<8x32xf32>
    %73 = arith.truncf %72 : vector<8x32xf32> to vector<8x32xbf16>
    %c0_20 = arith.constant 0 : index
    %c0_21 = arith.constant 0 : index
    %c0_22 = arith.constant 0 : index
    %74 = vector.load %arg3[%c0_20, %c0_21, %c0_22] : memref<1x8x32xbf16, #tpu.memory_space<vmem>>, vector<1x8x32xbf16>
    %75 = vector.shape_cast %74 : vector<1x8x32xbf16> to vector<8x32xbf16>
    %76 = vector.shape_cast %73 : vector<8x32xbf16> to vector<1x8x32xbf16>
    tpu.vector_store %arg3[%c0_20, %c0_21, %c0_22], %76 {strides = array<i32>} : memref<1x8x32xbf16, #tpu.memory_space<vmem>>, vector<1x8x32xbf16>,
    return
  }
  func.func @transform_0(%arg0: i32) -> (i32, i32, i32) {
    %c0_i32 = arith.constant 0 : i32
    %c0_i32_0 = arith.constant 0 : i32
    %c0_i32_1 = arith.constant 0 : i32
    return %arg0, %c0_i32, %c0_i32_0 : i32, i32, i32
  }
  func.func @transform_1(%arg0: i32) -> (i32, i32, i32) {
    %c0_i32 = arith.constant 0 : i32
    %c0_i32_0 = arith.constant 0 : i32
    %c0_i32_1 = arith.constant 0 : i32
    return %arg0, %c0_i32, %c0_i32_0 : i32, i32, i32
  }
  func.func @transform_2(%arg0: i32) -> (i32, i32, i32) {
    %c0_i32 = arith.constant 0 : i32
    %c0_i32_0 = arith.constant 0 : i32
    %c0_i32_1 = arith.constant 0 : i32
    return %arg0, %c0_i32, %c0_i32_0 : i32, i32, i32
  }
}

module attributes {stable_mosaic.version = 11 : i64} {
  func.func @_proj_res_ln_kernel(%arg0: i32, %arg1: memref<16x32xbf16, #tpu.memory_space<vmem>>, %arg2: memref<32x32xbf16, #tpu.memory_space<vmem>>, %arg3: memref<1x32xf32, #tpu.memory_space<vmem>>, %arg4: memref<16x32xf32, #tpu.memory_space<vmem>>, %arg5: memref<1x32xf32, #tpu.memory_space<vmem>>, %arg6: memref<1x32xf32, #tpu.memory_space<vmem>>, %arg7: memref<16x32xf32, #tpu.memory_space<vmem>>) attributes {dimension_semantics = [#tpu.dimension_semantics<parallel>], iteration_bounds = array<i64: 1>, scalar_prefetch = 0 : i64, scratch_operands = 0 : i64, tpu.core_type = #tpu.core_type<tc>, window_params = [{transform_indices = @transform_0, window_bounds = array<i64: 16, 32>}, {pipeline_mode = #tpu.pipeline_mode<synchronous>, transform_indices = @transform_1, window_bounds = array<i64: 32, 32>}, {pipeline_mode = #tpu.pipeline_mode<synchronous>, transform_indices = @transform_2, window_bounds = array<i64: 1, 32>}, {transform_indices = @transform_3, window_bounds = array<i64: 16, 32>}, {pipeline_mode = #tpu.pipeline_mode<synchronous>, transform_indices = @transform_4, window_bounds = array<i64: 1, 32>}, {pipeline_mode = #tpu.pipeline_mode<synchronous>, transform_indices = @transform_5, window_bounds = array<i64: 1, 32>}, {transform_indices = @transform_6, window_bounds = array<i64: 16, 32>}]} {
    %c0 = arith.constant 0 : index
    %c0_0 = arith.constant 0 : index
    %0 = vector.load %arg1[%c0, %c0_0] : memref<16x32xbf16, #tpu.memory_space<vmem>>, vector<16x32xbf16>
    %c0_1 = arith.constant 0 : index
    %c0_2 = arith.constant 0 : index
    %1 = vector.load %arg2[%c0_1, %c0_2] : memref<32x32xbf16, #tpu.memory_space<vmem>>, vector<32x32xbf16>
    %cst = arith.constant dense<0.000000e+00> : vector<16x32xf32>
    %2 = tpu.matmul %0, %1, %cst {dimension_numbers = #tpu.dot_dimension_numbers<[1], [0], [0], [1], [0, 0, 1, 1], [], []>} : vector<16x32xbf16>, vector<32x32xbf16>, vector<16x32xf32> -> vector<16x32xf32>
    %c0_3 = arith.constant 0 : index
    %c0_4 = arith.constant 0 : index
    %3 = vector.load %arg3[%c0_3, %c0_4] : memref<1x32xf32, #tpu.memory_space<vmem>>, vector<1x32xf32>
    %4 = vector.broadcast %3 : vector<1x32xf32> to vector<16x32xf32>
    %5 = arith.addf %2, %4 : vector<16x32xf32>
    %c0_5 = arith.constant 0 : index
    %c0_6 = arith.constant 0 : index
    %6 = vector.load %arg4[%c0_5, %c0_6] : memref<16x32xf32, #tpu.memory_space<vmem>>, vector<16x32xf32>
    %7 = arith.addf %5, %6 : vector<16x32xf32>
    %cst_7 = arith.constant dense<0.000000e+00> : vector<16xf32>
    %8 = vector.multi_reduction <add>, %7, %cst_7 [1] : vector<16x32xf32> to vector<16xf32>
    %9 = vector.shape_cast %8 : vector<16xf32> to vector<16x1xf32>
    %cst_8 = arith.constant 3.200000e+01 : f32
    %10 = vector.broadcast %cst_8 : f32 to vector<16x1xf32>
    %11 = arith.divf %9, %10 : vector<16x1xf32>
    %12 = vector.broadcast %11 : vector<16x1xf32> to vector<16x32xf32>
    %13 = arith.subf %7, %12 : vector<16x32xf32>
    %14 = arith.mulf %13, %13 : vector<16x32xf32>
    %cst_9 = arith.constant dense<0.000000e+00> : vector<16xf32>
    %15 = vector.multi_reduction <add>, %14, %cst_9 [1] : vector<16x32xf32> to vector<16xf32>
    %16 = vector.shape_cast %15 : vector<16xf32> to vector<16x1xf32>
    %cst_10 = arith.constant 3.200000e+01 : f32
    %17 = vector.broadcast %cst_10 : f32 to vector<16x1xf32>
    %18 = arith.divf %16, %17 : vector<16x1xf32>
    %19 = vector.broadcast %11 : vector<16x1xf32> to vector<16x32xf32>
    %20 = arith.subf %7, %19 : vector<16x32xf32>
    %cst_11 = arith.constant 9.99999974E-6 : f32
    %21 = vector.broadcast %cst_11 : f32 to vector<16x1xf32>
    %22 = arith.addf %18, %21 : vector<16x1xf32>
    %23 = math.rsqrt %22 : vector<16x1xf32>
    %24 = vector.broadcast %23 : vector<16x1xf32> to vector<16x32xf32>
    %25 = arith.mulf %20, %24 : vector<16x32xf32>
    %c0_12 = arith.constant 0 : index
    %c0_13 = arith.constant 0 : index
    %26 = vector.load %arg5[%c0_12, %c0_13] : memref<1x32xf32, #tpu.memory_space<vmem>>, vector<1x32xf32>
    %27 = vector.broadcast %26 : vector<1x32xf32> to vector<16x32xf32>
    %28 = arith.mulf %25, %27 : vector<16x32xf32>
    %c0_14 = arith.constant 0 : index
    %c0_15 = arith.constant 0 : index
    %29 = vector.load %arg6[%c0_14, %c0_15] : memref<1x32xf32, #tpu.memory_space<vmem>>, vector<1x32xf32>
    %30 = vector.broadcast %29 : vector<1x32xf32> to vector<16x32xf32>
    %31 = arith.addf %28, %30 : vector<16x32xf32>
    %c0_16 = arith.constant 0 : index
    %c0_17 = arith.constant 0 : index
    %32 = vector.load %arg7[%c0_16, %c0_17] : memref<16x32xf32, #tpu.memory_space<vmem>>, vector<16x32xf32>
    tpu.vector_store %arg7[%c0_16, %c0_17], %31 {strides = array<i32>} : memref<16x32xf32, #tpu.memory_space<vmem>>, vector<16x32xf32>,
    return
  }
  func.func @transform_0(%arg0: i32) -> (i32, i32) {
    %c0_i32 = arith.constant 0 : i32
    %c0_i32_0 = arith.constant 0 : i32
    return %arg0, %c0_i32 : i32, i32
  }
  func.func @transform_1(%arg0: i32) -> (i32, i32) {
    %c0_i32 = arith.constant 0 : i32
    %c0_i32_0 = arith.constant 0 : i32
    %c0_i32_1 = arith.constant 0 : i32
    return %c0_i32, %c0_i32_0 : i32, i32
  }
  func.func @transform_2(%arg0: i32) -> (i32, i32) {
    %c0_i32 = arith.constant 0 : i32
    %c0_i32_0 = arith.constant 0 : i32
    %c0_i32_1 = arith.constant 0 : i32
    return %c0_i32, %c0_i32_0 : i32, i32
  }
  func.func @transform_3(%arg0: i32) -> (i32, i32) {
    %c0_i32 = arith.constant 0 : i32
    %c0_i32_0 = arith.constant 0 : i32
    return %arg0, %c0_i32 : i32, i32
  }
  func.func @transform_4(%arg0: i32) -> (i32, i32) {
    %c0_i32 = arith.constant 0 : i32
    %c0_i32_0 = arith.constant 0 : i32
    %c0_i32_1 = arith.constant 0 : i32
    return %c0_i32, %c0_i32_0 : i32, i32
  }
  func.func @transform_5(%arg0: i32) -> (i32, i32) {
    %c0_i32 = arith.constant 0 : i32
    %c0_i32_0 = arith.constant 0 : i32
    %c0_i32_1 = arith.constant 0 : i32
    return %c0_i32, %c0_i32_0 : i32, i32
  }
  func.func @transform_6(%arg0: i32) -> (i32, i32) {
    %c0_i32 = arith.constant 0 : i32
    %c0_i32_0 = arith.constant 0 : i32
    return %arg0, %c0_i32 : i32, i32
  }
}

module attributes {stable_mosaic.version = 11 : i64} {
  func.func @_ffn_res_ln_kernel(%arg0: i32, %arg1: memref<16x32xf32, #tpu.memory_space<vmem>>, %arg2: memref<32x64xbf16, #tpu.memory_space<vmem>>, %arg3: memref<1x64xf32, #tpu.memory_space<vmem>>, %arg4: memref<64x32xbf16, #tpu.memory_space<vmem>>, %arg5: memref<1x32xf32, #tpu.memory_space<vmem>>, %arg6: memref<1x32xf32, #tpu.memory_space<vmem>>, %arg7: memref<1x32xf32, #tpu.memory_space<vmem>>, %arg8: memref<16x32xf32, #tpu.memory_space<vmem>>) attributes {dimension_semantics = [#tpu.dimension_semantics<parallel>], iteration_bounds = array<i64: 1>, scalar_prefetch = 0 : i64, scratch_operands = 0 : i64, tpu.core_type = #tpu.core_type<tc>, window_params = [{transform_indices = @transform_0, window_bounds = array<i64: 16, 32>}, {pipeline_mode = #tpu.pipeline_mode<synchronous>, transform_indices = @transform_1, window_bounds = array<i64: 32, 64>}, {pipeline_mode = #tpu.pipeline_mode<synchronous>, transform_indices = @transform_2, window_bounds = array<i64: 1, 64>}, {pipeline_mode = #tpu.pipeline_mode<synchronous>, transform_indices = @transform_3, window_bounds = array<i64: 64, 32>}, {pipeline_mode = #tpu.pipeline_mode<synchronous>, transform_indices = @transform_4, window_bounds = array<i64: 1, 32>}, {pipeline_mode = #tpu.pipeline_mode<synchronous>, transform_indices = @transform_5, window_bounds = array<i64: 1, 32>}, {pipeline_mode = #tpu.pipeline_mode<synchronous>, transform_indices = @transform_6, window_bounds = array<i64: 1, 32>}, {transform_indices = @transform_7, window_bounds = array<i64: 16, 32>}]} {
    %c0 = arith.constant 0 : index
    %c0_0 = arith.constant 0 : index
    %0 = vector.load %arg1[%c0, %c0_0] : memref<16x32xf32, #tpu.memory_space<vmem>>, vector<16x32xf32>
    %1 = arith.truncf %0 : vector<16x32xf32> to vector<16x32xbf16>
    %c0_1 = arith.constant 0 : index
    %c0_2 = arith.constant 0 : index
    %2 = vector.load %arg2[%c0_1, %c0_2] : memref<32x64xbf16, #tpu.memory_space<vmem>>, vector<32x64xbf16>
    %cst = arith.constant dense<0.000000e+00> : vector<16x64xf32>
    %3 = tpu.matmul %1, %2, %cst {dimension_numbers = #tpu.dot_dimension_numbers<[1], [0], [0], [1], [0, 0, 1, 1], [], []>} : vector<16x32xbf16>, vector<32x64xbf16>, vector<16x64xf32> -> vector<16x64xf32>
    %c0_3 = arith.constant 0 : index
    %c0_4 = arith.constant 0 : index
    %4 = vector.load %arg3[%c0_3, %c0_4] : memref<1x64xf32, #tpu.memory_space<vmem>>, vector<1x64xf32>
    %5 = vector.broadcast %4 : vector<1x64xf32> to vector<16x64xf32>
    %6 = arith.addf %3, %5 : vector<16x64xf32>
    %cst_5 = arith.constant 0.000000e+00 : f32
    %7 = vector.broadcast %cst_5 : f32 to vector<16x64xf32>
    %8 = arith.maximumf %6, %7 : vector<16x64xf32>
    %9 = arith.truncf %8 : vector<16x64xf32> to vector<16x64xbf16>
    %c0_6 = arith.constant 0 : index
    %c0_7 = arith.constant 0 : index
    %10 = vector.load %arg4[%c0_6, %c0_7] : memref<64x32xbf16, #tpu.memory_space<vmem>>, vector<64x32xbf16>
    %cst_8 = arith.constant dense<0.000000e+00> : vector<16x32xf32>
    %11 = tpu.matmul %9, %10, %cst_8 {dimension_numbers = #tpu.dot_dimension_numbers<[1], [0], [0], [1], [0, 0, 1, 1], [], []>} : vector<16x64xbf16>, vector<64x32xbf16>, vector<16x32xf32> -> vector<16x32xf32>
    %c0_9 = arith.constant 0 : index
    %c0_10 = arith.constant 0 : index
    %12 = vector.load %arg5[%c0_9, %c0_10] : memref<1x32xf32, #tpu.memory_space<vmem>>, vector<1x32xf32>
    %13 = vector.broadcast %12 : vector<1x32xf32> to vector<16x32xf32>
    %14 = arith.addf %11, %13 : vector<16x32xf32>
    %15 = arith.addf %14, %0 : vector<16x32xf32>
    %cst_11 = arith.constant dense<0.000000e+00> : vector<16xf32>
    %16 = vector.multi_reduction <add>, %15, %cst_11 [1] : vector<16x32xf32> to vector<16xf32>
    %17 = vector.shape_cast %16 : vector<16xf32> to vector<16x1xf32>
    %cst_12 = arith.constant 3.200000e+01 : f32
    %18 = vector.broadcast %cst_12 : f32 to vector<16x1xf32>
    %19 = arith.divf %17, %18 : vector<16x1xf32>
    %20 = vector.broadcast %19 : vector<16x1xf32> to vector<16x32xf32>
    %21 = arith.subf %15, %20 : vector<16x32xf32>
    %22 = arith.mulf %21, %21 : vector<16x32xf32>
    %cst_13 = arith.constant dense<0.000000e+00> : vector<16xf32>
    %23 = vector.multi_reduction <add>, %22, %cst_13 [1] : vector<16x32xf32> to vector<16xf32>
    %24 = vector.shape_cast %23 : vector<16xf32> to vector<16x1xf32>
    %cst_14 = arith.constant 3.200000e+01 : f32
    %25 = vector.broadcast %cst_14 : f32 to vector<16x1xf32>
    %26 = arith.divf %24, %25 : vector<16x1xf32>
    %27 = vector.broadcast %19 : vector<16x1xf32> to vector<16x32xf32>
    %28 = arith.subf %15, %27 : vector<16x32xf32>
    %cst_15 = arith.constant 9.99999974E-6 : f32
    %29 = vector.broadcast %cst_15 : f32 to vector<16x1xf32>
    %30 = arith.addf %26, %29 : vector<16x1xf32>
    %31 = math.rsqrt %30 : vector<16x1xf32>
    %32 = vector.broadcast %31 : vector<16x1xf32> to vector<16x32xf32>
    %33 = arith.mulf %28, %32 : vector<16x32xf32>
    %c0_16 = arith.constant 0 : index
    %c0_17 = arith.constant 0 : index
    %34 = vector.load %arg6[%c0_16, %c0_17] : memref<1x32xf32, #tpu.memory_space<vmem>>, vector<1x32xf32>
    %35 = vector.broadcast %34 : vector<1x32xf32> to vector<16x32xf32>
    %36 = arith.mulf %33, %35 : vector<16x32xf32>
    %c0_18 = arith.constant 0 : index
    %c0_19 = arith.constant 0 : index
    %37 = vector.load %arg7[%c0_18, %c0_19] : memref<1x32xf32, #tpu.memory_space<vmem>>, vector<1x32xf32>
    %38 = vector.broadcast %37 : vector<1x32xf32> to vector<16x32xf32>
    %39 = arith.addf %36, %38 : vector<16x32xf32>
    %c0_20 = arith.constant 0 : index
    %c0_21 = arith.constant 0 : index
    %40 = vector.load %arg8[%c0_20, %c0_21] : memref<16x32xf32, #tpu.memory_space<vmem>>, vector<16x32xf32>
    tpu.vector_store %arg8[%c0_20, %c0_21], %39 {strides = array<i32>} : memref<16x32xf32, #tpu.memory_space<vmem>>, vector<16x32xf32>,
    return
  }
  func.func @transform_0(%arg0: i32) -> (i32, i32) {
    %c0_i32 = arith.constant 0 : i32
    %c0_i32_0 = arith.constant 0 : i32
    return %arg0, %c0_i32 : i32, i32
  }
  func.func @transform_1(%arg0: i32) -> (i32, i32) {
    %c0_i32 = arith.constant 0 : i32
    %c0_i32_0 = arith.constant 0 : i32
    %c0_i32_1 = arith.constant 0 : i32
    return %c0_i32, %c0_i32_0 : i32, i32
  }
  func.func @transform_2(%arg0: i32) -> (i32, i32) {
    %c0_i32 = arith.constant 0 : i32
    %c0_i32_0 = arith.constant 0 : i32
    %c0_i32_1 = arith.constant 0 : i32
    return %c0_i32, %c0_i32_0 : i32, i32
  }
  func.func @transform_3(%arg0: i32) -> (i32, i32) {
    %c0_i32 = arith.constant 0 : i32
    %c0_i32_0 = arith.constant 0 : i32
    %c0_i32_1 = arith.constant 0 : i32
    return %c0_i32, %c0_i32_0 : i32, i32
  }
  func.func @transform_4(%arg0: i32) -> (i32, i32) {
    %c0_i32 = arith.constant 0 : i32
    %c0_i32_0 = arith.constant 0 : i32
    %c0_i32_1 = arith.constant 0 : i32
    return %c0_i32, %c0_i32_0 : i32, i32
  }
  func.func @transform_5(%arg0: i32) -> (i32, i32) {
    %c0_i32 = arith.constant 0 : i32
    %c0_i32_0 = arith.constant 0 : i32
    %c0_i32_1 = arith.constant 0 : i32
    return %c0_i32, %c0_i32_0 : i32, i32
  }
  func.func @transform_6(%arg0: i32) -> (i32, i32) {
    %c0_i32 = arith.constant 0 : i32
    %c0_i32_0 = arith.constant 0 : i32
    %c0_i32_1 = arith.constant 0 : i32
    return %c0_i32, %c0_i32_0 : i32, i32
  }
  func.func @transform_7(%arg0: i32) -> (i32, i32) {
    %c0_i32 = arith.constant 0 : i32
    %c0_i32_0 = arith.constant 0 : i32
    return %arg0, %c0_i32 : i32, i32
  }
}

module attributes {stable_mosaic.version = 11 : i64} {
  func.func @_linear_kernel(%arg0: i32, %arg1: i32, %arg2: memref<16x32xf32, #tpu.memory_space<vmem>>, %arg3: memref<32x96xbf16, #tpu.memory_space<vmem>>, %arg4: memref<1x96xf32, #tpu.memory_space<vmem>>, %arg5: memref<16x96xbf16, #tpu.memory_space<vmem>>) attributes {dimension_semantics = [#tpu.dimension_semantics<parallel>, #tpu.dimension_semantics<parallel>], iteration_bounds = array<i64: 1, 1>, scalar_prefetch = 0 : i64, scratch_operands = 0 : i64, tpu.core_type = #tpu.core_type<tc>, window_params = [{transform_indices = @transform_0, window_bounds = array<i64: 16, 32>}, {transform_indices = @transform_1, window_bounds = array<i64: 32, 96>}, {transform_indices = @transform_2, window_bounds = array<i64: 1, 96>}, {transform_indices = @transform_3, window_bounds = array<i64: 16, 96>}]} {
    %c0 = arith.constant 0 : index
    %c0_0 = arith.constant 0 : index
    %0 = vector.load %arg2[%c0, %c0_0] : memref<16x32xf32, #tpu.memory_space<vmem>>, vector<16x32xf32>
    %1 = arith.truncf %0 : vector<16x32xf32> to vector<16x32xbf16>
    %c0_1 = arith.constant 0 : index
    %c0_2 = arith.constant 0 : index
    %2 = vector.load %arg3[%c0_1, %c0_2] : memref<32x96xbf16, #tpu.memory_space<vmem>>, vector<32x96xbf16>
    %cst = arith.constant dense<0.000000e+00> : vector<16x96xf32>
    %3 = tpu.matmul %1, %2, %cst {dimension_numbers = #tpu.dot_dimension_numbers<[1], [0], [0], [1], [0, 0, 1, 1], [], []>} : vector<16x32xbf16>, vector<32x96xbf16>, vector<16x96xf32> -> vector<16x96xf32>
    %c0_3 = arith.constant 0 : index
    %c0_4 = arith.constant 0 : index
    %4 = vector.load %arg4[%c0_3, %c0_4] : memref<1x96xf32, #tpu.memory_space<vmem>>, vector<1x96xf32>
    %5 = vector.broadcast %4 : vector<1x96xf32> to vector<16x96xf32>
    %6 = arith.addf %3, %5 : vector<16x96xf32>
    %7 = arith.truncf %6 : vector<16x96xf32> to vector<16x96xbf16>
    %c0_5 = arith.constant 0 : index
    %c0_6 = arith.constant 0 : index
    %8 = vector.load %arg5[%c0_5, %c0_6] : memref<16x96xbf16, #tpu.memory_space<vmem>>, vector<16x96xbf16>
    tpu.vector_store %arg5[%c0_5, %c0_6], %7 {strides = array<i32>} : memref<16x96xbf16, #tpu.memory_space<vmem>>, vector<16x96xbf16>,
    return
  }
  func.func @transform_0(%arg0: i32, %arg1: i32) -> (i32, i32) {
    %c0_i32 = arith.constant 0 : i32
    %c0_i32_0 = arith.constant 0 : i32
    return %arg0, %c0_i32 : i32, i32
  }
  func.func @transform_1(%arg0: i32, %arg1: i32) -> (i32, i32) {
    %c0_i32 = arith.constant 0 : i32
    %c0_i32_0 = arith.constant 0 : i32
    return %c0_i32, %arg1 : i32, i32
  }
  func.func @transform_2(%arg0: i32, %arg1: i32) -> (i32, i32) {
    %c0_i32 = arith.constant 0 : i32
    %c0_i32_0 = arith.constant 0 : i32
    return %c0_i32, %arg1 : i32, i32
  }
  func.func @transform_3(%arg0: i32, %arg1: i32) -> (i32, i32) {
    %c0_i32 = arith.constant 0 : i32
    return %arg0, %arg1 : i32, i32
  }
}

module attributes {stable_mosaic.version = 11 : i64} {
  func.func @_proj_res_ln_kernel(%arg0: i32, %arg1: memref<16x32xbf16, #tpu.memory_space<vmem>>, %arg2: memref<32x32xbf16, #tpu.memory_space<vmem>>, %arg3: memref<1x32xf32, #tpu.memory_space<vmem>>, %arg4: memref<16x32xf32, #tpu.memory_space<vmem>>, %arg5: memref<1x32xf32, #tpu.memory_space<vmem>>, %arg6: memref<1x32xf32, #tpu.memory_space<vmem>>, %arg7: memref<16x32xf32, #tpu.memory_space<vmem>>) attributes {dimension_semantics = [#tpu.dimension_semantics<parallel>], iteration_bounds = array<i64: 1>, scalar_prefetch = 0 : i64, scratch_operands = 0 : i64, tpu.core_type = #tpu.core_type<tc>, window_params = [{transform_indices = @transform_0, window_bounds = array<i64: 16, 32>}, {pipeline_mode = #tpu.pipeline_mode<synchronous>, transform_indices = @transform_1, window_bounds = array<i64: 32, 32>}, {pipeline_mode = #tpu.pipeline_mode<synchronous>, transform_indices = @transform_2, window_bounds = array<i64: 1, 32>}, {transform_indices = @transform_3, window_bounds = array<i64: 16, 32>}, {pipeline_mode = #tpu.pipeline_mode<synchronous>, transform_indices = @transform_4, window_bounds = array<i64: 1, 32>}, {pipeline_mode = #tpu.pipeline_mode<synchronous>, transform_indices = @transform_5, window_bounds = array<i64: 1, 32>}, {transform_indices = @transform_6, window_bounds = array<i64: 16, 32>}]} {
    %c0 = arith.constant 0 : index
    %c0_0 = arith.constant 0 : index
    %0 = vector.load %arg1[%c0, %c0_0] : memref<16x32xbf16, #tpu.memory_space<vmem>>, vector<16x32xbf16>
    %c0_1 = arith.constant 0 : index
    %c0_2 = arith.constant 0 : index
    %1 = vector.load %arg2[%c0_1, %c0_2] : memref<32x32xbf16, #tpu.memory_space<vmem>>, vector<32x32xbf16>
    %cst = arith.constant dense<0.000000e+00> : vector<16x32xf32>
    %2 = tpu.matmul %0, %1, %cst {dimension_numbers = #tpu.dot_dimension_numbers<[1], [0], [0], [1], [0, 0, 1, 1], [], []>} : vector<16x32xbf16>, vector<32x32xbf16>, vector<16x32xf32> -> vector<16x32xf32>
    %c0_3 = arith.constant 0 : index
    %c0_4 = arith.constant 0 : index
    %3 = vector.load %arg3[%c0_3, %c0_4] : memref<1x32xf32, #tpu.memory_space<vmem>>, vector<1x32xf32>
    %4 = vector.broadcast %3 : vector<1x32xf32> to vector<16x32xf32>
    %5 = arith.addf %2, %4 : vector<16x32xf32>
    %c0_5 = arith.constant 0 : index
    %c0_6 = arith.constant 0 : index
    %6 = vector.load %arg4[%c0_5, %c0_6] : memref<16x32xf32, #tpu.memory_space<vmem>>, vector<16x32xf32>
    %7 = arith.addf %5, %6 : vector<16x32xf32>
    %cst_7 = arith.constant dense<0.000000e+00> : vector<16xf32>
    %8 = vector.multi_reduction <add>, %7, %cst_7 [1] : vector<16x32xf32> to vector<16xf32>
    %9 = vector.shape_cast %8 : vector<16xf32> to vector<16x1xf32>
    %cst_8 = arith.constant 3.200000e+01 : f32
    %10 = vector.broadcast %cst_8 : f32 to vector<16x1xf32>
    %11 = arith.divf %9, %10 : vector<16x1xf32>
    %12 = vector.broadcast %11 : vector<16x1xf32> to vector<16x32xf32>
    %13 = arith.subf %7, %12 : vector<16x32xf32>
    %14 = arith.mulf %13, %13 : vector<16x32xf32>
    %cst_9 = arith.constant dense<0.000000e+00> : vector<16xf32>
    %15 = vector.multi_reduction <add>, %14, %cst_9 [1] : vector<16x32xf32> to vector<16xf32>
    %16 = vector.shape_cast %15 : vector<16xf32> to vector<16x1xf32>
    %cst_10 = arith.constant 3.200000e+01 : f32
    %17 = vector.broadcast %cst_10 : f32 to vector<16x1xf32>
    %18 = arith.divf %16, %17 : vector<16x1xf32>
    %19 = vector.broadcast %11 : vector<16x1xf32> to vector<16x32xf32>
    %20 = arith.subf %7, %19 : vector<16x32xf32>
    %cst_11 = arith.constant 9.99999974E-6 : f32
    %21 = vector.broadcast %cst_11 : f32 to vector<16x1xf32>
    %22 = arith.addf %18, %21 : vector<16x1xf32>
    %23 = math.rsqrt %22 : vector<16x1xf32>
    %24 = vector.broadcast %23 : vector<16x1xf32> to vector<16x32xf32>
    %25 = arith.mulf %20, %24 : vector<16x32xf32>
    %c0_12 = arith.constant 0 : index
    %c0_13 = arith.constant 0 : index
    %26 = vector.load %arg5[%c0_12, %c0_13] : memref<1x32xf32, #tpu.memory_space<vmem>>, vector<1x32xf32>
    %27 = vector.broadcast %26 : vector<1x32xf32> to vector<16x32xf32>
    %28 = arith.mulf %25, %27 : vector<16x32xf32>
    %c0_14 = arith.constant 0 : index
    %c0_15 = arith.constant 0 : index
    %29 = vector.load %arg6[%c0_14, %c0_15] : memref<1x32xf32, #tpu.memory_space<vmem>>, vector<1x32xf32>
    %30 = vector.broadcast %29 : vector<1x32xf32> to vector<16x32xf32>
    %31 = arith.addf %28, %30 : vector<16x32xf32>
    %c0_16 = arith.constant 0 : index
    %c0_17 = arith.constant 0 : index
    %32 = vector.load %arg7[%c0_16, %c0_17] : memref<16x32xf32, #tpu.memory_space<vmem>>, vector<16x32xf32>
    tpu.vector_store %arg7[%c0_16, %c0_17], %31 {strides = array<i32>} : memref<16x32xf32, #tpu.memory_space<vmem>>, vector<16x32xf32>,
    return
  }
  func.func @transform_0(%arg0: i32) -> (i32, i32) {
    %c0_i32 = arith.constant 0 : i32
    %c0_i32_0 = arith.constant 0 : i32
    return %arg0, %c0_i32 : i32, i32
  }
  func.func @transform_1(%arg0: i32) -> (i32, i32) {
    %c0_i32 = arith.constant 0 : i32
    %c0_i32_0 = arith.constant 0 : i32
    %c0_i32_1 = arith.constant 0 : i32
    return %c0_i32, %c0_i32_0 : i32, i32
  }
  func.func @transform_2(%arg0: i32) -> (i32, i32) {
    %c0_i32 = arith.constant 0 : i32
    %c0_i32_0 = arith.constant 0 : i32
    %c0_i32_1 = arith.constant 0 : i32
    return %c0_i32, %c0_i32_0 : i32, i32
  }
  func.func @transform_3(%arg0: i32) -> (i32, i32) {
    %c0_i32 = arith.constant 0 : i32
    %c0_i32_0 = arith.constant 0 : i32
    return %arg0, %c0_i32 : i32, i32
  }
  func.func @transform_4(%arg0: i32) -> (i32, i32) {
    %c0_i32 = arith.constant 0 : i32
    %c0_i32_0 = arith.constant 0 : i32
    %c0_i32_1 = arith.constant 0 : i32
    return %c0_i32, %c0_i32_0 : i32, i32
  }
  func.func @transform_5(%arg0: i32) -> (i32, i32) {
    %c0_i32 = arith.constant 0 : i32
    %c0_i32_0 = arith.constant 0 : i32
    %c0_i32_1 = arith.constant 0 : i32
    return %c0_i32, %c0_i32_0 : i32, i32
  }
  func.func @transform_6(%arg0: i32) -> (i32, i32) {
    %c0_i32 = arith.constant 0 : i32
    %c0_i32_0 = arith.constant 0 : i32
    return %arg0, %c0_i32 : i32, i32
  }
}

module attributes {stable_mosaic.version = 11 : i64} {
  func.func @_ffn_res_ln_kernel(%arg0: i32, %arg1: memref<16x32xf32, #tpu.memory_space<vmem>>, %arg2: memref<32x64xbf16, #tpu.memory_space<vmem>>, %arg3: memref<1x64xf32, #tpu.memory_space<vmem>>, %arg4: memref<64x32xbf16, #tpu.memory_space<vmem>>, %arg5: memref<1x32xf32, #tpu.memory_space<vmem>>, %arg6: memref<1x32xf32, #tpu.memory_space<vmem>>, %arg7: memref<1x32xf32, #tpu.memory_space<vmem>>, %arg8: memref<16x32xf32, #tpu.memory_space<vmem>>) attributes {dimension_semantics = [#tpu.dimension_semantics<parallel>], iteration_bounds = array<i64: 1>, scalar_prefetch = 0 : i64, scratch_operands = 0 : i64, tpu.core_type = #tpu.core_type<tc>, window_params = [{transform_indices = @transform_0, window_bounds = array<i64: 16, 32>}, {pipeline_mode = #tpu.pipeline_mode<synchronous>, transform_indices = @transform_1, window_bounds = array<i64: 32, 64>}, {pipeline_mode = #tpu.pipeline_mode<synchronous>, transform_indices = @transform_2, window_bounds = array<i64: 1, 64>}, {pipeline_mode = #tpu.pipeline_mode<synchronous>, transform_indices = @transform_3, window_bounds = array<i64: 64, 32>}, {pipeline_mode = #tpu.pipeline_mode<synchronous>, transform_indices = @transform_4, window_bounds = array<i64: 1, 32>}, {pipeline_mode = #tpu.pipeline_mode<synchronous>, transform_indices = @transform_5, window_bounds = array<i64: 1, 32>}, {pipeline_mode = #tpu.pipeline_mode<synchronous>, transform_indices = @transform_6, window_bounds = array<i64: 1, 32>}, {transform_indices = @transform_7, window_bounds = array<i64: 16, 32>}]} {
    %c0 = arith.constant 0 : index
    %c0_0 = arith.constant 0 : index
    %0 = vector.load %arg1[%c0, %c0_0] : memref<16x32xf32, #tpu.memory_space<vmem>>, vector<16x32xf32>
    %1 = arith.truncf %0 : vector<16x32xf32> to vector<16x32xbf16>
    %c0_1 = arith.constant 0 : index
    %c0_2 = arith.constant 0 : index
    %2 = vector.load %arg2[%c0_1, %c0_2] : memref<32x64xbf16, #tpu.memory_space<vmem>>, vector<32x64xbf16>
    %cst = arith.constant dense<0.000000e+00> : vector<16x64xf32>
    %3 = tpu.matmul %1, %2, %cst {dimension_numbers = #tpu.dot_dimension_numbers<[1], [0], [0], [1], [0, 0, 1, 1], [], []>} : vector<16x32xbf16>, vector<32x64xbf16>, vector<16x64xf32> -> vector<16x64xf32>
    %c0_3 = arith.constant 0 : index
    %c0_4 = arith.constant 0 : index
    %4 = vector.load %arg3[%c0_3, %c0_4] : memref<1x64xf32, #tpu.memory_space<vmem>>, vector<1x64xf32>
    %5 = vector.broadcast %4 : vector<1x64xf32> to vector<16x64xf32>
    %6 = arith.addf %3, %5 : vector<16x64xf32>
    %cst_5 = arith.constant 0.000000e+00 : f32
    %7 = vector.broadcast %cst_5 : f32 to vector<16x64xf32>
    %8 = arith.maximumf %6, %7 : vector<16x64xf32>
    %9 = arith.truncf %8 : vector<16x64xf32> to vector<16x64xbf16>
    %c0_6 = arith.constant 0 : index
    %c0_7 = arith.constant 0 : index
    %10 = vector.load %arg4[%c0_6, %c0_7] : memref<64x32xbf16, #tpu.memory_space<vmem>>, vector<64x32xbf16>
    %cst_8 = arith.constant dense<0.000000e+00> : vector<16x32xf32>
    %11 = tpu.matmul %9, %10, %cst_8 {dimension_numbers = #tpu.dot_dimension_numbers<[1], [0], [0], [1], [0, 0, 1, 1], [], []>} : vector<16x64xbf16>, vector<64x32xbf16>, vector<16x32xf32> -> vector<16x32xf32>
    %c0_9 = arith.constant 0 : index
    %c0_10 = arith.constant 0 : index
    %12 = vector.load %arg5[%c0_9, %c0_10] : memref<1x32xf32, #tpu.memory_space<vmem>>, vector<1x32xf32>
    %13 = vector.broadcast %12 : vector<1x32xf32> to vector<16x32xf32>
    %14 = arith.addf %11, %13 : vector<16x32xf32>
    %15 = arith.addf %14, %0 : vector<16x32xf32>
    %cst_11 = arith.constant dense<0.000000e+00> : vector<16xf32>
    %16 = vector.multi_reduction <add>, %15, %cst_11 [1] : vector<16x32xf32> to vector<16xf32>
    %17 = vector.shape_cast %16 : vector<16xf32> to vector<16x1xf32>
    %cst_12 = arith.constant 3.200000e+01 : f32
    %18 = vector.broadcast %cst_12 : f32 to vector<16x1xf32>
    %19 = arith.divf %17, %18 : vector<16x1xf32>
    %20 = vector.broadcast %19 : vector<16x1xf32> to vector<16x32xf32>
    %21 = arith.subf %15, %20 : vector<16x32xf32>
    %22 = arith.mulf %21, %21 : vector<16x32xf32>
    %cst_13 = arith.constant dense<0.000000e+00> : vector<16xf32>
    %23 = vector.multi_reduction <add>, %22, %cst_13 [1] : vector<16x32xf32> to vector<16xf32>
    %24 = vector.shape_cast %23 : vector<16xf32> to vector<16x1xf32>
    %cst_14 = arith.constant 3.200000e+01 : f32
    %25 = vector.broadcast %cst_14 : f32 to vector<16x1xf32>
    %26 = arith.divf %24, %25 : vector<16x1xf32>
    %27 = vector.broadcast %19 : vector<16x1xf32> to vector<16x32xf32>
    %28 = arith.subf %15, %27 : vector<16x32xf32>
    %cst_15 = arith.constant 9.99999974E-6 : f32
    %29 = vector.broadcast %cst_15 : f32 to vector<16x1xf32>
    %30 = arith.addf %26, %29 : vector<16x1xf32>
    %31 = math.rsqrt %30 : vector<16x1xf32>
    %32 = vector.broadcast %31 : vector<16x1xf32> to vector<16x32xf32>
    %33 = arith.mulf %28, %32 : vector<16x32xf32>
    %c0_16 = arith.constant 0 : index
    %c0_17 = arith.constant 0 : index
    %34 = vector.load %arg6[%c0_16, %c0_17] : memref<1x32xf32, #tpu.memory_space<vmem>>, vector<1x32xf32>
    %35 = vector.broadcast %34 : vector<1x32xf32> to vector<16x32xf32>
    %36 = arith.mulf %33, %35 : vector<16x32xf32>
    %c0_18 = arith.constant 0 : index
    %c0_19 = arith.constant 0 : index
    %37 = vector.load %arg7[%c0_18, %c0_19] : memref<1x32xf32, #tpu.memory_space<vmem>>, vector<1x32xf32>
    %38 = vector.broadcast %37 : vector<1x32xf32> to vector<16x32xf32>
    %39 = arith.addf %36, %38 : vector<16x32xf32>
    %c0_20 = arith.constant 0 : index
    %c0_21 = arith.constant 0 : index
    %40 = vector.load %arg8[%c0_20, %c0_21] : memref<16x32xf32, #tpu.memory_space<vmem>>, vector<16x32xf32>
    tpu.vector_store %arg8[%c0_20, %c0_21], %39 {strides = array<i32>} : memref<16x32xf32, #tpu.memory_space<vmem>>, vector<16x32xf32>,
    return
  }
  func.func @transform_0(%arg0: i32) -> (i32, i32) {
    %c0_i32 = arith.constant 0 : i32
    %c0_i32_0 = arith.constant 0 : i32
    return %arg0, %c0_i32 : i32, i32
  }
  func.func @transform_1(%arg0: i32) -> (i32, i32) {
    %c0_i32 = arith.constant 0 : i32
    %c0_i32_0 = arith.constant 0 : i32
    %c0_i32_1 = arith.constant 0 : i32
    return %c0_i32, %c0_i32_0 : i32, i32
  }
  func.func @transform_2(%arg0: i32) -> (i32, i32) {
    %c0_i32 = arith.constant 0 : i32
    %c0_i32_0 = arith.constant 0 : i32
    %c0_i32_1 = arith.constant 0 : i32
    return %c0_i32, %c0_i32_0 : i32, i32
  }
  func.func @transform_3(%arg0: i32) -> (i32, i32) {
    %c0_i32 = arith.constant 0 : i32
    %c0_i32_0 = arith.constant 0 : i32
    %c0_i32_1 = arith.constant 0 : i32
    return %c0_i32, %c0_i32_0 : i32, i32
  }
  func.func @transform_4(%arg0: i32) -> (i32, i32) {
    %c0_i32 = arith.constant 0 : i32
    %c0_i32_0 = arith.constant 0 : i32
    %c0_i32_1 = arith.constant 0 : i32
    return %c0_i32, %c0_i32_0 : i32, i32
  }
  func.func @transform_5(%arg0: i32) -> (i32, i32) {
    %c0_i32 = arith.constant 0 : i32
    %c0_i32_0 = arith.constant 0 : i32
    %c0_i32_1 = arith.constant 0 : i32
    return %c0_i32, %c0_i32_0 : i32, i32
  }
  func.func @transform_6(%arg0: i32) -> (i32, i32) {
    %c0_i32 = arith.constant 0 : i32
    %c0_i32_0 = arith.constant 0 : i32
    %c0_i32_1 = arith.constant 0 : i32
    return %c0_i32, %c0_i32_0 : i32, i32
  }
  func.func @transform_7(%arg0: i32) -> (i32, i32) {
    %c0_i32 = arith.constant 0 : i32
    %c0_i32_0 = arith.constant 0 : i32
    return %arg0, %c0_i32 : i32, i32
  }
}

module attributes {stable_mosaic.version = 11 : i64} {
  func.func @_ln_kernel(%arg0: i32, %arg1: memref<16x32xf32, #tpu.memory_space<vmem>>, %arg2: memref<1x32xf32, #tpu.memory_space<vmem>>, %arg3: memref<1x32xf32, #tpu.memory_space<vmem>>, %arg4: memref<16x32xf32, #tpu.memory_space<vmem>>) attributes {dimension_semantics = [#tpu.dimension_semantics<parallel>], iteration_bounds = array<i64: 1>, scalar_prefetch = 0 : i64, scratch_operands = 0 : i64, tpu.core_type = #tpu.core_type<tc>, window_params = [{transform_indices = @transform_0, window_bounds = array<i64: 16, 32>}, {pipeline_mode = #tpu.pipeline_mode<synchronous>, transform_indices = @transform_1, window_bounds = array<i64: 1, 32>}, {pipeline_mode = #tpu.pipeline_mode<synchronous>, transform_indices = @transform_2, window_bounds = array<i64: 1, 32>}, {transform_indices = @transform_3, window_bounds = array<i64: 16, 32>}]} {
    %c0 = arith.constant 0 : index
    %c0_0 = arith.constant 0 : index
    %0 = vector.load %arg1[%c0, %c0_0] : memref<16x32xf32, #tpu.memory_space<vmem>>, vector<16x32xf32>
    %cst = arith.constant dense<0.000000e+00> : vector<16xf32>
    %1 = vector.multi_reduction <add>, %0, %cst [1] : vector<16x32xf32> to vector<16xf32>
    %2 = vector.shape_cast %1 : vector<16xf32> to vector<16x1xf32>
    %cst_1 = arith.constant 3.200000e+01 : f32
    %3 = vector.broadcast %cst_1 : f32 to vector<16x1xf32>
    %4 = arith.divf %2, %3 : vector<16x1xf32>
    %5 = vector.broadcast %4 : vector<16x1xf32> to vector<16x32xf32>
    %6 = arith.subf %0, %5 : vector<16x32xf32>
    %7 = arith.mulf %6, %6 : vector<16x32xf32>
    %cst_2 = arith.constant dense<0.000000e+00> : vector<16xf32>
    %8 = vector.multi_reduction <add>, %7, %cst_2 [1] : vector<16x32xf32> to vector<16xf32>
    %9 = vector.shape_cast %8 : vector<16xf32> to vector<16x1xf32>
    %cst_3 = arith.constant 3.200000e+01 : f32
    %10 = vector.broadcast %cst_3 : f32 to vector<16x1xf32>
    %11 = arith.divf %9, %10 : vector<16x1xf32>
    %12 = vector.broadcast %4 : vector<16x1xf32> to vector<16x32xf32>
    %13 = arith.subf %0, %12 : vector<16x32xf32>
    %cst_4 = arith.constant 9.99999974E-6 : f32
    %14 = vector.broadcast %cst_4 : f32 to vector<16x1xf32>
    %15 = arith.addf %11, %14 : vector<16x1xf32>
    %16 = math.rsqrt %15 : vector<16x1xf32>
    %17 = vector.broadcast %16 : vector<16x1xf32> to vector<16x32xf32>
    %18 = arith.mulf %13, %17 : vector<16x32xf32>
    %c0_5 = arith.constant 0 : index
    %c0_6 = arith.constant 0 : index
    %19 = vector.load %arg2[%c0_5, %c0_6] : memref<1x32xf32, #tpu.memory_space<vmem>>, vector<1x32xf32>
    %20 = vector.broadcast %19 : vector<1x32xf32> to vector<16x32xf32>
    %21 = arith.mulf %18, %20 : vector<16x32xf32>
    %c0_7 = arith.constant 0 : index
    %c0_8 = arith.constant 0 : index
    %22 = vector.load %arg3[%c0_7, %c0_8] : memref<1x32xf32, #tpu.memory_space<vmem>>, vector<1x32xf32>
    %23 = vector.broadcast %22 : vector<1x32xf32> to vector<16x32xf32>
    %24 = arith.addf %21, %23 : vector<16x32xf32>
    %c0_9 = arith.constant 0 : index
    %c0_10 = arith.constant 0 : index
    %25 = vector.load %arg4[%c0_9, %c0_10] : memref<16x32xf32, #tpu.memory_space<vmem>>, vector<16x32xf32>
    tpu.vector_store %arg4[%c0_9, %c0_10], %24 {strides = array<i32>} : memref<16x32xf32, #tpu.memory_space<vmem>>, vector<16x32xf32>,
    return
  }
  func.func @transform_0(%arg0: i32) -> (i32, i32) {
    %c0_i32 = arith.constant 0 : i32
    %c0_i32_0 = arith.constant 0 : i32
    return %arg0, %c0_i32 : i32, i32
  }
  func.func @transform_1(%arg0: i32) -> (i32, i32) {
    %c0_i32 = arith.constant 0 : i32
    %c0_i32_0 = arith.constant 0 : i32
    %c0_i32_1 = arith.constant 0 : i32
    return %c0_i32, %c0_i32_0 : i32, i32
  }
  func.func @transform_2(%arg0: i32) -> (i32, i32) {
    %c0_i32 = arith.constant 0 : i32
    %c0_i32_0 = arith.constant 0 : i32
    %c0_i32_1 = arith.constant 0 : i32
    return %c0_i32, %c0_i32_0 : i32, i32
  }
  func.func @transform_3(%arg0: i32) -> (i32, i32) {
    %c0_i32 = arith.constant 0 : i32
    %c0_i32_0 = arith.constant 0 : i32
    return %arg0, %c0_i32 : i32, i32
  }
}

</mosaic_0001>

<llo_original>
// kernel: encoder_forward.11
$region0: #{encoder_forward.11}
  #allocation0 [shape = 'u32[]', space=smem, size = 0x4, offset = 0x4, fixed_abs, tag = 'smem constant byte address 0x4 - core index']
  #allocation1 [shape = 'u32[72,128]{1,0:T(1,128)}', space=vmem, size = 0x9000, scoped, tag = 'internal scratch']
  %s0 = inlined_call_operand.vmem [shape: f32[16,32], index: 0, kind: input, shape index: {}]
  %s1 = inlined_call_operand.hbm [shape: bf16[32,96], index: 1, kind: input, shape index: {}]
  %s2 = inlined_call_operand.hbm [shape: f32[1,96], index: 2, kind: input, shape index: {}]
  %s3 = inlined_call_operand.vmem [shape: bf16[16,96], index: 3, kind: output, shape index: {}]
  %s4 = sld [smem:[#allocation0]]
  $region30: #{encoder_forward.11} parent=0
    _
  %s6 = ssub.s32 1, %s4
  %s7 = scalar_select 0, %s6, %s4
  $region1: #{encoder_forward.11} parent=0
    #allocation2 [shape = 'u8[8192]{0}', space=vmem, size = 0x2000, scoped, tag = 'input window, operand 1, single buffered']
    #allocation3 [shape = 's32[1]{0}', space=sflag, size = 0x4, scoped, tag = 'scoped memory for encoder_forward.11']
    #allocation4 [shape = 'u8[512]{0}', space=vmem, size = 0x400, scoped, tag = 'input window, operand 2, single buffered']
    #allocation5 [shape = 's32[1]{0}', space=sflag, size = 0x4, scoped, tag = 'scoped memory for encoder_forward.11']
    %8 = vsyncpa [#allocation3], 0
    %9 = vsyncpa [#allocation5], 0
    // Predicated region
    $region2: #{encoder_forward.11} parent=1 // pred_check
      _
    $region3: #{encoder_forward.11} parent=1 // pred_check_branch
      %11 = sbr.rel (0) target = $region5
    $region4: #{encoder_forward.11} parent=1 // pred_region
      _
    $region5: #{encoder_forward.11} parent=1 // pred_fallthru
      _
    // Predicated region
    $region6: #{encoder_forward.11} parent=1 // pred_check
      _
    $region7: #{encoder_forward.11} parent=1 // pred_check_branch
      %13 = sbr.rel (0) target = $region9
    $region8: #{encoder_forward.11} parent=1 // pred_region
      %15 = vsyncadd [#allocation3], 0
      %s16 = sshll.u32 %s1, 4
      %s17 = int_to_ptr.hbm [resolvable:$true] %s16
      %s18 = sshll.u32 [#allocation2], 4
      %s19 = int_to_ptr.vmem [resolvable:$true] %s18
      %24 = dma.hbm_to_vmem [thread:$0]  %s17, 256, %s19, [#allocation3], 64, 64, 4
    $region9: #{encoder_forward.11} parent=1 // pred_fallthru
      _
    // Predicated region
    $region10: #{encoder_forward.11} parent=1 // pred_check
      _
    $region11: #{encoder_forward.11} parent=1 // pred_check_branch
      %26 = sbr.rel (0) target = $region13
    $region12: #{encoder_forward.11} parent=1 // pred_region
      %28 = vsyncadd [#allocation5], 0
      %s30 = sshll.u32 %s2, 4
      %s31 = int_to_ptr.hbm [resolvable:$true] %s30
      %s32 = sshll.u32 [#allocation4], 4
      %s33 = int_to_ptr.vmem [resolvable:$true] %s32
      %35 = dma.hbm_to_vmem [thread:$0]  %s31, 16, %s33, [#allocation5]
    $region13: #{encoder_forward.11} parent=1 // pred_fallthru
      _
    // Predicated region
    $region14: #{encoder_forward.11} parent=1 // pred_check
      _
    $region15: #{encoder_forward.11} parent=1 // pred_check_branch
      %37 = sbr.rel (0) target = $region17
    $region16: #{encoder_forward.11} parent=1 // pred_region
      %39 = dma.done [#allocation3], 256
    $region17: #{encoder_forward.11} parent=1 // pred_fallthru
      _
    // Predicated region
    $region18: #{encoder_forward.11} parent=1 // pred_check
      _
    $region19: #{encoder_forward.11} parent=1 // pred_check_branch
      %41 = sbr.rel (0) target = $region21
    $region20: #{encoder_forward.11} parent=1 // pred_region
      %43 = dma.done [#allocation5], 16
    $region21: #{encoder_forward.11} parent=1 // pred_fallthru
      _
    %v45 = vld [vmem:[%s0] sm:$0xff]
    %v46 = vld [vmem:[%s0 + $0x8] sm:$0xff]
    %v47 = vpack.c.bf16 %v46, %v45
    %v48 = vld [vmem:[#allocation2] sm:$0xf]
    %v49 = vld [vmem:[#allocation2 + $0x4] sm:$0xf]
    %v50 = vld [vmem:[#allocation2 + $0x8] sm:$0xf]
    %v51 = vld [vmem:[#allocation2 + $0xc] sm:$0xf]
    %v52 = vld [vmem:[#allocation4] sm:$0x1]
    %v54 = vperm.slane %v52, 0
    %v60 = vunpack.c.l.b16 %v48
    %v61 = vunpack.c.l.b16 %v49
    %v62 = vunpack.c.l.b16 %v50
    %v63 = vunpack.c.l.b16 %v51
    %v64 = vpack.c.b16 %v61, %v60
    %v65 = vpack.c.b16 %v63, %v62
    %vm68 = vcmask 261120
    %v70 = vsel %vm68, %v47, 0
    %72 = vmatpush.bf16.msra.mxu0 0
    %73 = vmatpush.bf16.msra.mxu0 0
    %74 = vmatpush.bf16.msra.mxu0 0
    %75 = vmatpush.bf16.msra.mxu0 0
    %76 = vmatpush.bf16.msra.mxu0 0
    %77 = vmatpush.bf16.msra.mxu0 0
    %78 = vmatpush.bf16.msra.mxu0 %v65
    %79 = vmatpush.bf16.msra.mxu0 %v64
    %80 = vmatmul.bf16.gmra.mxu0 %v70
    %v81 = vpop.f32.mrf.mxu0
    %v82 = vadd.f32 %v54, %v81
    %v83 = vpop.f32.mrf.mxu0
    %v84 = vadd.f32 %v54, %v83
    %85 = vdwg.mxu0
    %v86 = vpack.c.bf16 %v82, %v82
    %v87 = vpack.c.bf16 %v84, %v84
    %vm88 = vcmask 781312
    %89 = vst.msk [vmem:[%s3] sm:$0xf] %vm88, %v86
    %90 = vst.msk [vmem:[%s3 + $0x4] sm:$0xf] %vm88, %v87
    // Predicated region
    $region22: #{encoder_forward.11} parent=1 // pred_check
      _
    $region23: #{encoder_forward.11} parent=1 // pred_check_branch
      %92 = sbr.rel (0) target = $region25
    $region24: #{encoder_forward.11} parent=1 // pred_region
      _
    $region25: #{encoder_forward.11} parent=1 // pred_fallthru
      _
    // Predicated region
    $region26: #{encoder_forward.11} parent=1 // pred_check
      _
    $region27: #{encoder_forward.11} parent=1 // pred_check_branch
      %94 = sbr.rel (0) target = $region29
    $region28: #{encoder_forward.11} parent=1 // pred_region
      _
    $region29: #{encoder_forward.11} parent=1 // pred_fallthru
      _
    %95 = vsyncpa [#allocation3], 1
    %96 = vsyncpa [#allocation5], 1

// kernel: encoder_forward.13
$region0: #{encoder_forward.13}
  #allocation0 [shape = 'u32[]', space=smem, size = 0x4, offset = 0x4, fixed_abs, tag = 'smem constant byte address 0x4 - core index']
  #allocation1 [shape = 'u32[72,128]{1,0:T(1,128)}', space=vmem, size = 0x9000, scoped, tag = 'internal scratch']
  %s0 = inlined_call_operand.vmem [shape: bf16[16,32], index: 0, kind: input, shape index: {}]
  %s1 = inlined_call_operand.hbm [shape: bf16[32,32], index: 1, kind: input, shape index: {}]
  %s2 = inlined_call_operand.hbm [shape: f32[1,32], index: 2, kind: input, shape index: {}]
  %s3 = inlined_call_operand.vmem [shape: f32[16,32], index: 3, kind: input, shape index: {}]
  %s4 = inlined_call_operand.hbm [shape: f32[1,32], index: 4, kind: input, shape index: {}]
  %s5 = inlined_call_operand.hbm [shape: f32[1,32], index: 5, kind: input, shape index: {}]
  %s6 = inlined_call_operand.vmem [shape: f32[16,32], index: 6, kind: output, shape index: {}]
  %s7 = sld [smem:[#allocation0]]
  $region50: #{encoder_forward.13} parent=0
    _
  %s9 = ssub.s32 1, %s7
  %s10 = scalar_select 0, %s9, %s7
  $region1: #{encoder_forward.13} parent=0
    #allocation2 [shape = 'u8[8192]{0}', space=vmem, size = 0x2000, scoped, tag = 'input window, operand 1, single buffered']
    #allocation3 [shape = 's32[1]{0}', space=sflag, size = 0x4, scoped, tag = 'scoped memory for encoder_forward.13']
    #allocation4 [shape = 'u8[512]{0}', space=vmem, size = 0x400, scoped, tag = 'input window, operand 2, single buffered']
    #allocation5 [shape = 's32[1]{0}', space=sflag, size = 0x4, scoped, tag = 'scoped memory for encoder_forward.13']
    #allocation6 [shape = 'u8[512]{0}', space=vmem, size = 0x400, scoped, tag = 'input window, operand 4, single buffered']
    #allocation7 [shape = 'u8[512]{0}', space=vmem, size = 0x400, scoped, tag = 'input window, operand 5, single buffered']
    #allocation8 [shape = 's32[1]{0}', space=sflag, size = 0x4, scoped, tag = 'scoped memory for encoder_forward.13']
    %11 = vsyncpa [#allocation3], 0
    %12 = vsyncpa [#allocation5], 0
    %13 = vsyncpa [#allocation8], 0
    // Predicated region
    $region2: #{encoder_forward.13} parent=1 // pred_check
      _
    $region3: #{encoder_forward.13} parent=1 // pred_check_branch
      %15 = sbr.rel (0) target = $region5
    $region4: #{encoder_forward.13} parent=1 // pred_region
      _
    $region5: #{encoder_forward.13} parent=1 // pred_fallthru
      _
    // Predicated region
    $region6: #{encoder_forward.13} parent=1 // pred_check
      _
    $region7: #{encoder_forward.13} parent=1 // pred_check_branch
      %17 = sbr.rel (0) target = $region9
    $region8: #{encoder_forward.13} parent=1 // pred_region
      %19 = vsyncadd [#allocation3], 0
      %s20 = sshll.u32 %s1, 4
      %s21 = int_to_ptr.hbm [resolvable:$true] %s20
      %s22 = sshll.u32 [#allocation2], 4
      %s23 = int_to_ptr.vmem [resolvable:$true] %s22
      %28 = dma.hbm_to_vmem [thread:$0]  %s21, 256, %s23, [#allocation3], 64, 64, 4
    $region9: #{encoder_forward.13} parent=1 // pred_fallthru
      _
    // Predicated region
    $region10: #{encoder_forward.13} parent=1 // pred_check
      _
    $region11: #{encoder_forward.13} parent=1 // pred_check_branch
      %30 = sbr.rel (0) target = $region13
    $region12: #{encoder_forward.13} parent=1 // pred_region
      %32 = vsyncadd [#allocation5], 0
      %s34 = sshll.u32 %s2, 4
      %s35 = int_to_ptr.hbm [resolvable:$true] %s34
      %s36 = sshll.u32 [#allocation4], 4
      %s37 = int_to_ptr.vmem [resolvable:$true] %s36
      %39 = dma.hbm_to_vmem [thread:$0]  %s35, 16, %s37, [#allocation5]
    $region13: #{encoder_forward.13} parent=1 // pred_fallthru
      _
    // Predicated region
    $region14: #{encoder_forward.13} parent=1 // pred_check
      _
    $region15: #{encoder_forward.13} parent=1 // pred_check_branch
      %41 = sbr.rel (0) target = $region17
    $region16: #{encoder_forward.13} parent=1 // pred_region
      _
    $region17: #{encoder_forward.13} parent=1 // pred_fallthru
      _
    // Predicated region
    $region18: #{encoder_forward.13} parent=1 // pred_check
      _
    $region19: #{encoder_forward.13} parent=1 // pred_check_branch
      %43 = sbr.rel (0) target = $region21
    $region20: #{encoder_forward.13} parent=1 // pred_region
      %45 = vsyncadd [#allocation5], 0
      %s47 = sshll.u32 %s4, 4
      %s48 = int_to_ptr.hbm [resolvable:$true] %s47
      %s49 = sshll.u32 [#allocation6], 4
      %s50 = int_to_ptr.vmem [resolvable:$true] %s49
      %52 = dma.hbm_to_vmem [thread:$0]  %s48, 16, %s50, [#allocation5]
    $region21: #{encoder_forward.13} parent=1 // pred_fallthru
      _
    // Predicated region
    $region22: #{encoder_forward.13} parent=1 // pred_check
      _
    $region23: #{encoder_forward.13} parent=1 // pred_check_branch
      %54 = sbr.rel (0) target = $region25
    $region24: #{encoder_forward.13} parent=1 // pred_region
      %56 = vsyncadd [#allocation8], 0
      %s58 = sshll.u32 %s5, 4
      %s59 = int_to_ptr.hbm [resolvable:$true] %s58
      %s60 = sshll.u32 [#allocation7], 4
      %s61 = int_to_ptr.vmem [resolvable:$true] %s60
      %63 = dma.hbm_to_vmem [thread:$0]  %s59, 16, %s61, [#allocation8]
    $region25: #{encoder_forward.13} parent=1 // pred_fallthru
      _
    // Predicated region
    $region26: #{encoder_forward.13} parent=1 // pred_check
      _
    $region27: #{encoder_forward.13} parent=1 // pred_check_branch
      %65 = sbr.rel (0) target = $region29
    $region28: #{encoder_forward.13} parent=1 // pred_region
      %67 = dma.done [#allocation3], 256
    $region29: #{encoder_forward.13} parent=1 // pred_fallthru
      _
    // Predicated region
    $region30: #{encoder_forward.13} parent=1 // pred_check
      _
    $region31: #{encoder_forward.13} parent=1 // pred_check_branch
      %69 = sbr.rel (0) target = $region33
    $region32: #{encoder_forward.13} parent=1 // pred_region
      %71 = dma.done [#allocation5], 16
    $region33: #{encoder_forward.13} parent=1 // pred_fallthru
      _
    // Predicated region
    $region34: #{encoder_forward.13} parent=1 // pred_check
      _
    $region35: #{encoder_forward.13} parent=1 // pred_check_branch
      %73 = sbr.rel (0) target = $region37
    $region36: #{encoder_forward.13} parent=1 // pred_region
      %75 = dma.done [#allocation5], 16
    $region37: #{encoder_forward.13} parent=1 // pred_fallthru
      _
    // Predicated region
    $region38: #{encoder_forward.13} parent=1 // pred_check
      _
    $region39: #{encoder_forward.13} parent=1 // pred_check_branch
      %77 = sbr.rel (0) target = $region41
    $region40: #{encoder_forward.13} parent=1 // pred_region
      %79 = dma.done [#allocation8], 16
    $region41: #{encoder_forward.13} parent=1 // pred_fallthru
      _
    %v81 = vld [vmem:[%s0] sm:$0xf]
    %v82 = vld [vmem:[%s0 + $0x4] sm:$0xf]
    %v83 = vld [vmem:[#allocation2] sm:$0xf]
    %v84 = vld [vmem:[#allocation2 + $0x4] sm:$0xf]
    %v85 = vld [vmem:[#allocation2 + $0x8] sm:$0xf]
    %v86 = vld [vmem:[#allocation2 + $0xc] sm:$0xf]
    %v87 = vld [vmem:[#allocation4] sm:$0x1]
    %v89 = vperm.slane %v87, 0
    %v93 = vunpack.c.l.b16 %v81
    %v94 = vunpack.c.l.b16 %v82
    %v95 = vpack.c.b16 %v94, %v93
    %v100 = vunpack.c.l.b16 %v83
    %v101 = vunpack.c.l.b16 %v84
    %v102 = vunpack.c.l.b16 %v85
    %v103 = vunpack.c.l.b16 %v86
    %v104 = vpack.c.b16 %v101, %v100
    %v105 = vpack.c.b16 %v103, %v102
    %vm108 = vcmask 261120
    %v110 = vsel %vm108, %v95, 0
    %112 = vmatpush.bf16.msra.mxu0 0
    %113 = vmatpush.bf16.msra.mxu0 0
    %114 = vmatpush.bf16.msra.mxu0 0
    %115 = vmatpush.bf16.msra.mxu0 0
    %116 = vmatpush.bf16.msra.mxu0 0
    %117 = vmatpush.bf16.msra.mxu0 0
    %118 = vmatpush.bf16.msra.mxu0 %v105
    %119 = vmatpush.bf16.msra.mxu0 %v104
    %120 = vmatmul.bf16.gmra.mxu0 %v110
    %v121 = vpop.f32.mrf.mxu0
    %v122 = vadd.f32 %v89, %v121
    %v123 = vpop.f32.mrf.mxu0
    %v124 = vadd.f32 %v89, %v123
    %125 = vdwg.mxu0
    %v126 = vld [vmem:[%s3] sm:$0xff]
    %v127 = vld [vmem:[%s3 + $0x8] sm:$0xff]
    %v128 = vadd.f32 %v122, %v126
    %v129 = vadd.f32 %v124, %v127
    %v130 = vsel %vm108, %v128, 0.0
    %131 = vadd.xlane.f32.xlu0 %v130
    %v132 = vpop.xlane.xlu0 %131
    %v133 = vsel %vm108, %v129, 0.0
    %134 = vadd.xlane.f32.xlu0 %v133
    %v135 = vpop.xlane.xlu0 %134
    %v136 = vrcp.pop 32.0
    %v137 = vmul.f32 32.0, %v136
    %v138 = vsub.f32 1.0, %v137
    %v139 = vmul.f32 %v136, %v138
    %v140 = vadd.f32 %v136, %v139
    %vm141 = vweird.f32 %v136
    %v142 = vsel %vm141, %v136, %v140
    %v143 = vmul.f32 %v132, %v142
    %v144 = vmul.f32 %v135, %v142
    %v145 = vsub.f32 %v128, %v143
    %v146 = vsub.f32 %v129, %v144
    %v147 = vmul.f32 %v145, %v145
    %v148 = vmul.f32 %v146, %v146
    %v149 = vsel %vm108, %v147, 0.0
    %150 = vadd.xlane.f32.xlu0 %v149
    %v151 = vpop.xlane.xlu0 %150
    %v152 = vsel %vm108, %v148, 0.0
    %153 = vadd.xlane.f32.xlu0 %v152
    %v154 = vpop.xlane.xlu0 %153
    %v155 = vmul.f32 %v151, %v142
    %v156 = vmul.f32 %v154, %v142
    %v157 = vadd.f32 %v155, 1e-05
    %v158 = vadd.f32 %v156, 1e-05
    %v159 = vrsqrt.pop %v157
    %v160 = vmul.f32 %v159, %v157
    %v161 = vmul.f32 %v160, %v159
    %v162 = vmul.f32 0.5, %v161
    %v163 = vsub.f32 1.5, %v162
    %v164 = vmul.f32 %v159, %v163
    %vm165 = vweird.f32 %v157
    %vm166 = vweird.f32 %v159
    %vm167 = vmor %vm165, %vm166
    %v168 = vsel %vm167, %v159, %v164
    %v169 = vrsqrt.pop %v158
    %v170 = vmul.f32 %v169, %v158
    %v171 = vmul.f32 %v170, %v169
    %v172 = vmul.f32 0.5, %v171
    %v173 = vsub.f32 1.5, %v172
    %v174 = vmul.f32 %v169, %v173
    %vm175 = vweird.f32 %v158
    %vm176 = vweird.f32 %v169
    %vm177 = vmor %vm175, %vm176
    %v178 = vsel %vm177, %v169, %v174
    %v179 = vmul.f32 %v145, %v168
    %v180 = vmul.f32 %v146, %v178
    %v181 = vld [vmem:[#allocation6] sm:$0x1]
    %v183 = vperm.slane %v181, 0
    %v185 = vmul.f32 %v179, %v183
    %v186 = vmul.f32 %v180, %v183
    %v187 = vld [vmem:[#allocation7] sm:$0x1]
    %v189 = vperm.slane %v187, 0
    %v191 = vadd.f32 %v185, %v189
    %v192 = vadd.f32 %v186, %v189
    %193 = vst.msk [vmem:[%s6] sm:$0xff] %vm108, %v191
    %194 = vst.msk [vmem:[%s6 + $0x8] sm:$0xff] %vm108, %v192
    // Predicated region
    $region42: #{encoder_forward.13} parent=1 // pred_check
      _
    $region43: #{encoder_forward.13} parent=1 // pred_check_branch
      %196 = sbr.rel (0) target = $region45
    $region44: #{encoder_forward.13} parent=1 // pred_region
      _
    $region45: #{encoder_forward.13} parent=1 // pred_fallthru
      _
    // Predicated region
    $region46: #{encoder_forward.13} parent=1 // pred_check
      _
    $region47: #{encoder_forward.13} parent=1 // pred_check_branch
      %198 = sbr.rel (0) target = $region49
    $region48: #{encoder_forward.13} parent=1 // pred_region
      _
    $region49: #{encoder_forward.13} parent=1 // pred_fallthru
      _
    %199 = vsyncpa [#allocation3], 1
    %200 = vsyncpa [#allocation5], 1
    %201 = vsyncpa [#allocation8], 1

// kernel: encoder_forward.10
$region0: #{encoder_forward.10}
  #allocation0 [shape = 'u32[]', space=smem, size = 0x4, offset = 0x4, fixed_abs, tag = 'smem constant byte address 0x4 - core index']
  #allocation1 [shape = 'u32[72,128]{1,0:T(1,128)}', space=vmem, size = 0x9000, scoped, tag = 'internal scratch']
  %s0 = inlined_call_operand.vmem [shape: f32[16,16], index: 0, kind: input, shape index: {}]
  %s1 = inlined_call_operand.hbm [shape: bf16[16,32], index: 1, kind: input, shape index: {}]
  %s2 = inlined_call_operand.hbm [shape: f32[1,32], index: 2, kind: input, shape index: {}]
  %s3 = inlined_call_operand.vmem [shape: f32[16,32], index: 3, kind: output, shape index: {}]
  %s4 = sld [smem:[#allocation0]]
  $region30: #{encoder_forward.10} parent=0
    _
  %s6 = ssub.s32 1, %s4
  %s7 = scalar_select 0, %s6, %s4
  $region1: #{encoder_forward.10} parent=0
    #allocation2 [shape = 'u8[4096]{0}', space=vmem, size = 0x1000, scoped, tag = 'input window, operand 1, single buffered']
    #allocation3 [shape = 's32[1]{0}', space=sflag, size = 0x4, scoped, tag = 'scoped memory for encoder_forward.10']
    #allocation4 [shape = 'u8[512]{0}', space=vmem, size = 0x400, scoped, tag = 'input window, operand 2, single buffered']
    #allocation5 [shape = 's32[1]{0}', space=sflag, size = 0x4, scoped, tag = 'scoped memory for encoder_forward.10']
    %8 = vsyncpa [#allocation3], 0
    %9 = vsyncpa [#allocation5], 0
    // Predicated region
    $region2: #{encoder_forward.10} parent=1 // pred_check
      _
    $region3: #{encoder_forward.10} parent=1 // pred_check_branch
      %11 = sbr.rel (0) target = $region5
    $region4: #{encoder_forward.10} parent=1 // pred_region
      _
    $region5: #{encoder_forward.10} parent=1 // pred_fallthru
      _
    // Predicated region
    $region6: #{encoder_forward.10} parent=1 // pred_check
      _
    $region7: #{encoder_forward.10} parent=1 // pred_check_branch
      %13 = sbr.rel (0) target = $region9
    $region8: #{encoder_forward.10} parent=1 // pred_region
      %15 = vsyncadd [#allocation3], 0
      %s16 = sshll.u32 %s1, 4
      %s17 = int_to_ptr.hbm [resolvable:$true] %s16
      %s18 = sshll.u32 [#allocation2], 4
      %s19 = int_to_ptr.vmem [resolvable:$true] %s18
      %24 = dma.hbm_to_vmem [thread:$0]  %s17, 128, %s19, [#allocation3], 64, 64, 4
    $region9: #{encoder_forward.10} parent=1 // pred_fallthru
      _
    // Predicated region
    $region10: #{encoder_forward.10} parent=1 // pred_check
      _
    $region11: #{encoder_forward.10} parent=1 // pred_check_branch
      %26 = sbr.rel (0) target = $region13
    $region12: #{encoder_forward.10} parent=1 // pred_region
      %28 = vsyncadd [#allocation5], 0
      %s30 = sshll.u32 %s2, 4
      %s31 = int_to_ptr.hbm [resolvable:$true] %s30
      %s32 = sshll.u32 [#allocation4], 4
      %s33 = int_to_ptr.vmem [resolvable:$true] %s32
      %35 = dma.hbm_to_vmem [thread:$0]  %s31, 16, %s33, [#allocation5]
    $region13: #{encoder_forward.10} parent=1 // pred_fallthru
      _
    // Predicated region
    $region14: #{encoder_forward.10} parent=1 // pred_check
      _
    $region15: #{encoder_forward.10} parent=1 // pred_check_branch
      %37 = sbr.rel (0) target = $region17
    $region16: #{encoder_forward.10} parent=1 // pred_region
      %39 = dma.done [#allocation3], 128
    $region17: #{encoder_forward.10} parent=1 // pred_fallthru
      _
    // Predicated region
    $region18: #{encoder_forward.10} parent=1 // pred_check
      _
    $region19: #{encoder_forward.10} parent=1 // pred_check_branch
      %41 = sbr.rel (0) target = $region21
    $region20: #{encoder_forward.10} parent=1 // pred_region
      %43 = dma.done [#allocation5], 16
    $region21: #{encoder_forward.10} parent=1 // pred_fallthru
      _
    %v45 = vld [vmem:[%s0] sm:$0xff]
    %v46 = vld [vmem:[%s0 + $0x8] sm:$0xff]
    %v47 = vpack.c.bf16 %v46, %v45
    %v48 = vld [vmem:[#allocation2] sm:$0xf]
    %v49 = vld [vmem:[#allocation2 + $0x4] sm:$0xf]
    %v50 = vld [vmem:[#allocation4] sm:$0x1]
    %v52 = vperm.slane %v50, 0
    %v56 = vunpack.c.l.b16 %v48
    %v57 = vunpack.c.l.b16 %v49
    %v58 = vpack.c.b16 %v57, %v56
    %vm60 = vcmask 130048
    %v62 = vsel %vm60, %v47, 0
    %64 = vmatpush.bf16.msra.mxu0 0
    %65 = vmatpush.bf16.msra.mxu0 0
    %66 = vmatpush.bf16.msra.mxu0 0
    %67 = vmatpush.bf16.msra.mxu0 0
    %68 = vmatpush.bf16.msra.mxu0 0
    %69 = vmatpush.bf16.msra.mxu0 0
    %70 = vmatpush.bf16.msra.mxu0 0
    %71 = vmatpush.bf16.msra.mxu0 %v58
    %72 = vmatmul.bf16.gmra.mxu0 %v62
    %v73 = vpop.f32.mrf.mxu0
    %v74 = vadd.f32 %v52, %v73
    %v75 = vpop.f32.mrf.mxu0
    %v76 = vadd.f32 %v52, %v75
    %77 = vdwg.mxu0
    %vm78 = vcmask 261120
    %79 = vst.msk [vmem:[%s3] sm:$0xff] %vm78, %v74
    %80 = vst.msk [vmem:[%s3 + $0x8] sm:$0xff] %vm78, %v76
    // Predicated region
    $region22: #{encoder_forward.10} parent=1 // pred_check
      _
    $region23: #{encoder_forward.10} parent=1 // pred_check_branch
      %82 = sbr.rel (0) target = $region25
    $region24: #{encoder_forward.10} parent=1 // pred_region
      _
    $region25: #{encoder_forward.10} parent=1 // pred_fallthru
      _
    // Predicated region
    $region26: #{encoder_forward.10} parent=1 // pred_check
      _
    $region27: #{encoder_forward.10} parent=1 // pred_check_branch
      %84 = sbr.rel (0) target = $region29
    $region28: #{encoder_forward.10} parent=1 // pred_region
      _
    $region29: #{encoder_forward.10} parent=1 // pred_fallthru
      _
    %85 = vsyncpa [#allocation3], 1
    %86 = vsyncpa [#allocation5], 1

// kernel: encoder_forward.12
$region0: #{encoder_forward.12}
  #allocation0 [shape = 'u32[]', space=smem, size = 0x4, offset = 0x4, fixed_abs, tag = 'smem constant byte address 0x4 - core index']
  #allocation1 [shape = 'u32[72,128]{1,0:T(1,128)}', space=vmem, size = 0x9000, scoped, tag = 'internal scratch']
  %s0 = inlined_call_operand.vmem [shape: bf16[2,8,96], index: 0, kind: input, shape index: {}]
  %s1 = inlined_call_operand.vmem [shape: f32[2,1,8], index: 1, kind: input, shape index: {}]
  %s2 = inlined_call_operand.vmem [shape: bf16[2,8,32], index: 2, kind: output, shape index: {}]
  %s3 = sld [smem:[#allocation0]]
  $region41: #{encoder_forward.12} parent=0
    _
  %s5 = ssub.s32 1, %s3
  %s6 = scalar_select 0, %s5, %s3
  loop: start=0, step=1, limit=4
  $region2: #{encoder_forward.12} parent=0 // loop_pre_header
    _
  $region3: #{encoder_forward.12} parent=0 // loop_header
    %s8 = sphi 0, %s12
    %p9 = scmp.ge.s32.totalorder %s8, 4
    %s18 = sphi 0, %s20
    %s21 = sphi 0, %s18
    %s22 = sphi 0, %s21
    %s38 = sphi 0, %s22
    %s44 = sphi 0, %s46
    %s47 = sphi 0, %s44
    %s48 = sphi 0, %s47
    %s64 = sphi 0, %s48
    %s70 = sphi 0, %s72
    %s73 = sphi 0, %s70
    %s74 = sphi 0, %s73
    %s90 = sphi 0, %s74
  $region4: #{encoder_forward.12} parent=0 // loop_header_branch
    %11 = sbr.rel (%p9) target = $region8
  $region5: #{encoder_forward.12} parent=0 // loop_body
    %s13 = ssub.s32 %s8, 1
    %s14 = ssub.s32 %s8, 2
    %s15 = sadd.s32 %s8, 1
    %s16 = ssub.s32 %s8, %s15
    %p17 = scmp.eq.s32.totalorder %s16, 0
    %s19 = sadd.s32 %s18, 1
    %s20 = scalar_select %p17, %s18, %s19
    %p23 = pneg %p17
    %p24 = scmp.eq.s32.totalorder %s8, 1
    %p25 = por %p23, %p24
    %p26 = scmp.ne.s32.totalorder %s18, %s21
    %p27 = scmp.eq.s32.totalorder %s8, 0
    %p28 = por %p26, %p27
    %p29 = scmp.ne.s32.totalorder %s18, %s21
    %p30 = scmp.eq.s32.totalorder %s13, 1
    %p31 = por %p29, %p30
    %p32 = scmp.ne.s32.totalorder %s21, %s22
    %p33 = scmp.eq.s32.totalorder %s13, 0
    %p34 = por %p32, %p33
    %p35 = scmp.ne.s32.totalorder %s21, %s22
    %p36 = scmp.eq.s32.totalorder %s14, 1
    %p37 = por %p35, %p36
    %p39 = scmp.ne.s32.totalorder %s22, %s38
    %p40 = scmp.eq.s32.totalorder %s14, 0
    %p41 = por %p39, %p40
    %s42 = ssub.s32 %s8, %s15
    %p43 = scmp.eq.s32.totalorder %s42, 0
    %s45 = sadd.s32 %s44, 1
    %s46 = scalar_select %p43, %s44, %s45
    %p49 = pneg %p43
    %p50 = scmp.eq.s32.totalorder %s8, 1
    %p51 = por %p49, %p50
    %p52 = scmp.ne.s32.totalorder %s44, %s47
    %p53 = scmp.eq.s32.totalorder %s8, 0
    %p54 = por %p52, %p53
    %p55 = scmp.ne.s32.totalorder %s44, %s47
    %p56 = scmp.eq.s32.totalorder %s13, 1
    %p57 = por %p55, %p56
    %p58 = scmp.ne.s32.totalorder %s47, %s48
    %p59 = scmp.eq.s32.totalorder %s13, 0
    %p60 = por %p58, %p59
    %p61 = scmp.ne.s32.totalorder %s47, %s48
    %p62 = scmp.eq.s32.totalorder %s14, 1
    %p63 = por %p61, %p62
    %p65 = scmp.ne.s32.totalorder %s48, %s64
    %p66 = scmp.eq.s32.totalorder %s14, 0
    %p67 = por %p65, %p66
    %s68 = ssub.s32 %s8, %s15
    %p69 = scmp.eq.s32.totalorder %s68, 0
    %s71 = sadd.s32 %s70, 1
    %s72 = scalar_select %p69, %s70, %s71
    %p75 = pneg %p69
    %p76 = scmp.eq.s32.totalorder %s8, 1
    %p77 = por %p75, %p76
    %p78 = scmp.ne.s32.totalorder %s70, %s73
    %p79 = scmp.eq.s32.totalorder %s8, 0
    %p80 = por %p78, %p79
    %p81 = scmp.ne.s32.totalorder %s70, %s73
    %p82 = scmp.eq.s32.totalorder %s13, 1
    %p83 = por %p81, %p82
    %p84 = scmp.ne.s32.totalorder %s73, %s74
    %p85 = scmp.eq.s32.totalorder %s13, 0
    %p86 = por %p84, %p85
    %p87 = scmp.ne.s32.totalorder %s73, %s74
    %p88 = scmp.eq.s32.totalorder %s14, 1
    %p89 = por %p87, %p88
    %p91 = scmp.ne.s32.totalorder %s74, %s90
    %p92 = scmp.eq.s32.totalorder %s14, 0
    %p93 = por %p91, %p92
    %p94 = scmp.le.s32.totalorder 1, %s8
    %p95 = scmp.lt.s32.totalorder %s8, 3
    %p96 = pnand %p94, %p95
    %p97 = pneg %p96
    // Predicated region
    $region9: #{encoder_forward.12} parent=5 // pred_check
      _
    $region10: #{encoder_forward.12} parent=5 // pred_check_branch
      %99 = sbr.rel (%p96) target = $region12
    $region11: #{encoder_forward.12} parent=5 // pred_region
      %s100 = ssub.s32 %s8, 1
    $region12: #{encoder_forward.12} parent=5 // pred_fallthru
      _
    %p101 = scmp.lt.s32.totalorder %s8, 2
    // Predicated region
    $region13: #{encoder_forward.12} parent=5 // pred_check
      %p102 = pneg %p101
    $region14: #{encoder_forward.12} parent=5 // pred_check_branch
      %104 = sbr.rel (%p102) target = $region16
    $region15: #{encoder_forward.12} parent=5 // pred_region
      // Predicated region
      $region17: #{encoder_forward.12} parent=15 // pred_check
        %p105 = pneg %p28
      $region18: #{encoder_forward.12} parent=15 // pred_check_branch
        %107 = sbr.rel (%p105) target = $region20
      $region19: #{encoder_forward.12} parent=15 // pred_region
        %p108 = scmp.lt.s32.totalorder %s8, 1
        %s109 = scalar_select %p108, %s8, 1
        %s110 = smul.addr %s109, 4
        %s111 = scalar_lea.vmem %s0, %s110
      $region20: #{encoder_forward.12} parent=15 // pred_fallthru
        _
      // Predicated region
      $region21: #{encoder_forward.12} parent=15 // pred_check
        %p112 = pneg %p54
      $region22: #{encoder_forward.12} parent=15 // pred_check_branch
        %114 = sbr.rel (%p112) target = $region24
      $region23: #{encoder_forward.12} parent=15 // pred_region
        %p115 = scmp.lt.s32.totalorder %s8, 1
        %s116 = scalar_select %p115, %s8, 1
        %s117 = scalar_lea.vmem %s1, %s116
      $region24: #{encoder_forward.12} parent=15 // pred_fallthru
        _
    $region16: #{encoder_forward.12} parent=5 // pred_fallthru
      _
    %p118 = scmp.le.s32.totalorder 1, %s8
    %p119 = scmp.lt.s32.totalorder %s8, 3
    %p120 = pnand %p118, %p119
    %p121 = pneg %p120
    // Predicated region
    $region25: #{encoder_forward.12} parent=5 // pred_check
      _
    $region26: #{encoder_forward.12} parent=5 // pred_check_branch
      %123 = sbr.rel (%p120) target = $region28
    $region27: #{encoder_forward.12} parent=5 // pred_region
      %s124 = ssub.s32 %s8, 1
      %p125 = scmp.lt.s32.totalorder %s13, 1
      %s126 = scalar_select %p125, %s13, 1
      %s127 = smul.addr %s126, 4
      %s128 = scalar_lea.vmem %s0, %s127
      %p129 = pneg %p34
      %p130 = pneg %p31
      %p131 = scmp.lt.s32.totalorder %s13, 1
      %s132 = scalar_select %p131, %s13, 1
      %s133 = scalar_lea.vmem %s1, %s132
      %p134 = pneg %p60
      %p135 = pneg %p57
      %p136 = pneg %p86
      %p137 = pneg %p83
      %p138 = scmp.lt.s32.totalorder %s13, 1
      %s139 = scalar_select %p138, %s13, 1
      %s140 = smul.addr %s139, 4
      %s141 = scalar_lea.vmem %s2, %s140
      %p142 = scmp.lt.s32.totalorder %s13, 1
      %s143 = scalar_select %p142, %s13, 1
      %s144 = smul.addr %s143, 4
      %s145 = scalar_lea.vmem %s0, %s144
      %p146 = scmp.lt.s32.totalorder %s13, 1
      %s147 = scalar_select %p146, %s13, 1
      %s148 = scalar_lea.vmem %s1, %s147
      %p149 = scmp.lt.s32.totalorder %s13, 1
      %s150 = scalar_select %p149, %s13, 1
      %s151 = smul.addr %s150, 4
      %s152 = scalar_lea.vmem %s2, %s151
      %v154 = vld [vmem:[%s145] sm:$0xf]
      %v155 = vld [vmem:[%s148] sm:$0x1]
      %v157 = vperm.slane %v155, 0
      %v160 = vunpack.c.l.b16 %v154
      %v161 = vpack.c.b16 %v160, %v160
      %162 = vrot.lane.b32.xlu0 %v161, 96
      %v163 = vpop.permute.xlu0 %162
      %vm164 = vcmask 64512
      %v166 = vsel %vm164, %v154, 0
      %v169 = vsel %vm164, %v163, 0
      %171 = vmatpush.bf16.xpose.msra.mxu0 0
      %172 = vmatpush.bf16.xpose.msra.mxu0 0
      %173 = vmatpush.bf16.xpose.msra.mxu0 0
      %174 = vmatpush.bf16.xpose.msra.mxu0 0
      %175 = vmatpush.bf16.xpose.msra.mxu0 0
      %176 = vmatpush.bf16.xpose.msra.mxu0 0
      %177 = vmatpush.bf16.xpose.msra.mxu0 0
      %178 = vmatpush.bf16.xpose.msra.mxu0 %v169
      %179 = vmatmul.bf16.gmra.mxu0 %v166
      %v180 = vpop.f32.mrf.mxu0
      %v181 = vadd.f32 %v157, %v180
      %v182 = vpop.f32.mrf.mxu0
      %183 = vdwg.mxu0
      %v184 = vsel %vm164, %v181, -inf
      %185 = vmax.xlane.f32.xlu0 %v184
      %v186 = vpop.xlane.xlu0 %185
      %v187 = vsub.f32 %v181, %v186
      %v188 = vmul.f32 %v187, 1.442695
      %v189 = vpow.pop %v188
      %v190 = vsel %vm164, %v189, 0.0
      %191 = vadd.xlane.f32.xlu0 %v190
      %v192 = vpop.xlane.xlu0 %191
      %v193 = vrcp.pop %v192
      %v194 = vmul.f32 %v192, %v193
      %v195 = vsub.f32 1.0, %v194
      %v196 = vmul.f32 %v193, %v195
      %v197 = vadd.f32 %v193, %v196
      %vm198 = vweird.f32 %v192
      %vm199 = vweird.f32 %v193
      %vm200 = vmor %vm198, %vm199
      %v201 = vsel %vm200, %v193, %v197
      %v202 = vand.u32 2147483647, %v192
      %vm203 = vcmp.eq.f32.partialorder %v202, 8.507059e+37
      %v204 = vand.u32 %v192, 2147483648
      %v205 = vor.u32 1.1754944e-38, %v204
      %v206 = vsel %vm203, %v205, %v201
      %v207 = vmul.f32 %v189, %v206
      %v208 = vpack.c.bf16 %v207, %v207
      %209 = vrot.lane.b32.xlu0 %v161, 64
      %v210 = vpop.permute.xlu0 %209
      %v212 = vsel %vm164, %v208, 0
      %vm214 = vcmask 1043456
      %v216 = vsel %vm214, %v210, 0
      %218 = vmatpush.bf16.msra.mxu0 0
      %219 = vmatpush.bf16.msra.mxu0 0
      %220 = vmatpush.bf16.msra.mxu0 0
      %221 = vmatpush.bf16.msra.mxu0 0
      %222 = vmatpush.bf16.msra.mxu0 0
      %223 = vmatpush.bf16.msra.mxu0 0
      %224 = vmatpush.bf16.msra.mxu0 0
      %225 = vmatpush.bf16.msra.mxu0 %v216
      %226 = vmatmul.bf16.gmra.mxu0 %v212
      %v227 = vpop.f32.mrf.mxu0
      %v228 = vadd.f32 0.0, %v227
      %v229 = vpop.f32.mrf.mxu0
      %230 = vdwg.mxu0
      %231 = vrot.lane.b32.xlu0 %v161, 120
      %v232 = vpop.permute.xlu0 %231
      %233 = vrot.lane.b32.xlu0 %v161, 88
      %v234 = vpop.permute.xlu0 %233
      %v236 = vsel %vm164, %v232, 0
      %v239 = vsel %vm164, %v234, 0
      %241 = vmatpush.bf16.xpose.msra.mxu0 0
      %242 = vmatpush.bf16.xpose.msra.mxu0 0
      %243 = vmatpush.bf16.xpose.msra.mxu0 0
      %244 = vmatpush.bf16.xpose.msra.mxu0 0
      %245 = vmatpush.bf16.xpose.msra.mxu0 0
      %246 = vmatpush.bf16.xpose.msra.mxu0 0
      %247 = vmatpush.bf16.xpose.msra.mxu0 0
      %248 = vmatpush.bf16.xpose.msra.mxu0 %v239
      %249 = vmatmul.bf16.gmra.mxu0 %v236
      %v250 = vpop.f32.mrf.mxu0
      %v251 = vadd.f32 %v157, %v250
      %v252 = vpop.f32.mrf.mxu0
      %253 = vdwg.mxu0
      %v254 = vsel %vm164, %v251, -inf
      %255 = vmax.xlane.f32.xlu0 %v254
      %v256 = vpop.xlane.xlu0 %255
      %v257 = vsub.f32 %v251, %v256
      %v258 = vmul.f32 %v257, 1.442695
      %v259 = vpow.pop %v258
      %v260 = vsel %vm164, %v259, 0.0
      %261 = vadd.xlane.f32.xlu0 %v260
      %v262 = vpop.xlane.xlu0 %261
      %v263 = vrcp.pop %v262
      %v264 = vmul.f32 %v262, %v263
      %v265 = vsub.f32 1.0, %v264
      %v266 = vmul.f32 %v263, %v265
      %v267 = vadd.f32 %v263, %v266
      %vm268 = vweird.f32 %v262
      %vm269 = vweird.f32 %v263
      %vm270 = vmor %vm268, %vm269
      %v271 = vsel %vm270, %v263, %v267
      %v272 = vand.u32 2147483647, %v262
      %vm273 = vcmp.eq.f32.partialorder %v272, 8.507059e+37
      %v274 = vand.u32 %v262, 2147483648
      %v275 = vor.u32 1.1754944e-38, %v274
      %v276 = vsel %vm273, %v275, %v271
      %v277 = vmul.f32 %v259, %v276
      %v278 = vpack.c.bf16 %v277, %v277
      %279 = vrot.lane.b32.xlu0 %v161, 56
      %v280 = vpop.permute.xlu0 %279
      %v282 = vsel %vm164, %v278, 0
      %v285 = vsel %vm214, %v280, 0
      %287 = vmatpush.bf16.msra.mxu0 0
      %288 = vmatpush.bf16.msra.mxu0 0
      %289 = vmatpush.bf16.msra.mxu0 0
      %290 = vmatpush.bf16.msra.mxu0 0
      %291 = vmatpush.bf16.msra.mxu0 0
      %292 = vmatpush.bf16.msra.mxu0 0
      %293 = vmatpush.bf16.msra.mxu0 0
      %294 = vmatpush.bf16.msra.mxu0 %v285
      %295 = vmatmul.bf16.gmra.mxu0 %v282
      %v296 = vpop.f32.mrf.mxu0
      %v297 = vadd.f32 0.0, %v296
      %v298 = vpop.f32.mrf.mxu0
      %299 = vdwg.mxu0
      %300 = vrot.lane.b32.xlu0 %v161, 112
      %v301 = vpop.permute.xlu0 %300
      %302 = vrot.lane.b32.xlu0 %v161, 80
      %v303 = vpop.permute.xlu0 %302
      %v305 = vsel %vm164, %v301, 0
      %v308 = vsel %vm164, %v303, 0
      %310 = vmatpush.bf16.xpose.msra.mxu0 0
      %311 = vmatpush.bf16.xpose.msra.mxu0 0
      %312 = vmatpush.bf16.xpose.msra.mxu0 0
      %313 = vmatpush.bf16.xpose.msra.mxu0 0
      %314 = vmatpush.bf16.xpose.msra.mxu0 0
      %315 = vmatpush.bf16.xpose.msra.mxu0 0
      %316 = vmatpush.bf16.xpose.msra.mxu0 0
      %317 = vmatpush.bf16.xpose.msra.mxu0 %v308
      %318 = vmatmul.bf16.gmra.mxu0 %v305
      %v319 = vpop.f32.mrf.mxu0
      %v320 = vadd.f32 %v157, %v319
      %v321 = vpop.f32.mrf.mxu0
      %322 = vdwg.mxu0
      %v323 = vsel %vm164, %v320, -inf
      %324 = vmax.xlane.f32.xlu0 %v323
      %v325 = vpop.xlane.xlu0 %324
      %v326 = vsub.f32 %v320, %v325
      %v327 = vmul.f32 %v326, 1.442695
      %v328 = vpow.pop %v327
      %v329 = vsel %vm164, %v328, 0.0
      %330 = vadd.xlane.f32.xlu0 %v329
      %v331 = vpop.xlane.xlu0 %330
      %v332 = vrcp.pop %v331
      %v333 = vmul.f32 %v331, %v332
      %v334 = vsub.f32 1.0, %v333
      %v335 = vmul.f32 %v332, %v334
      %v336 = vadd.f32 %v332, %v335
      %vm337 = vweird.f32 %v331
      %vm338 = vweird.f32 %v332
      %vm339 = vmor %vm337, %vm338
      %v340 = vsel %vm339, %v332, %v336
      %v341 = vand.u32 2147483647, %v331
      %vm342 = vcmp.eq.f32.partialorder %v341, 8.507059e+37
      %v343 = vand.u32 %v331, 2147483648
      %v344 = vor.u32 1.1754944e-38, %v343
      %v345 = vsel %vm342, %v344, %v340
      %v346 = vmul.f32 %v328, %v345
      %v347 = vpack.c.bf16 %v346, %v346
      %348 = vrot.lane.b32.xlu0 %v161, 48
      %v349 = vpop.permute.xlu0 %348
      %v351 = vsel %vm164, %v347, 0
      %v354 = vsel %vm214, %v349, 0
      %356 = vmatpush.bf16.msra.mxu0 0
      %357 = vmatpush.bf16.msra.mxu0 0
      %358 = vmatpush.bf16.msra.mxu0 0
      %359 = vmatpush.bf16.msra.mxu0 0
      %360 = vmatpush.bf16.msra.mxu0 0
      %361 = vmatpush.bf16.msra.mxu0 0
      %362 = vmatpush.bf16.msra.mxu0 0
      %363 = vmatpush.bf16.msra.mxu0 %v354
      %364 = vmatmul.bf16.gmra.mxu0 %v351
      %v365 = vpop.f32.mrf.mxu0
      %v366 = vadd.f32 0.0, %v365
      %v367 = vpop.f32.mrf.mxu0
      %368 = vdwg.mxu0
      %369 = vrot.lane.b32.xlu0 %v161, 104
      %v370 = vpop.permute.xlu0 %369
      %371 = vrot.lane.b32.xlu0 %v161, 72
      %v372 = vpop.permute.xlu0 %371
      %v374 = vsel %vm164, %v370, 0
      %v377 = vsel %vm164, %v372, 0
      %379 = vmatpush.bf16.xpose.msra.mxu0 0
      %380 = vmatpush.bf16.xpose.msra.mxu0 0
      %381 = vmatpush.bf16.xpose.msra.mxu0 0
      %382 = vmatpush.bf16.xpose.msra.mxu0 0
      %383 = vmatpush.bf16.xpose.msra.mxu0 0
      %384 = vmatpush.bf16.xpose.msra.mxu0 0
      %385 = vmatpush.bf16.xpose.msra.mxu0 0
      %386 = vmatpush.bf16.xpose.msra.mxu0 %v377
      %387 = vmatmul.bf16.gmra.mxu0 %v374
      %v388 = vpop.f32.mrf.mxu0
      %v389 = vadd.f32 %v157, %v388
      %v390 = vpop.f32.mrf.mxu0
      %391 = vdwg.mxu0
      %v392 = vsel %vm164, %v389, -inf
      %393 = vmax.xlane.f32.xlu0 %v392
      %v394 = vpop.xlane.xlu0 %393
      %v395 = vsub.f32 %v389, %v394
      %v396 = vmul.f32 %v395, 1.442695
      %v397 = vpow.pop %v396
      %v398 = vsel %vm164, %v397, 0.0
      %399 = vadd.xlane.f32.xlu0 %v398
      %v400 = vpop.xlane.xlu0 %399
      %v401 = vrcp.pop %v400
      %v402 = vmul.f32 %v400, %v401
      %v403 = vsub.f32 1.0, %v402
      %v404 = vmul.f32 %v401, %v403
      %v405 = vadd.f32 %v401, %v404
      %vm406 = vweird.f32 %v400
      %vm407 = vweird.f32 %v401
      %vm408 = vmor %vm406, %vm407
      %v409 = vsel %vm408, %v401, %v405
      %v410 = vand.u32 2147483647, %v400
      %vm411 = vcmp.eq.f32.partialorder %v410, 8.507059e+37
      %v412 = vand.u32 %v400, 2147483648
      %v413 = vor.u32 1.1754944e-38, %v412
      %v414 = vsel %vm411, %v413, %v409
      %v415 = vmul.f32 %v397, %v414
      %v416 = vpack.c.bf16 %v415, %v415
      %417 = vrot.lane.b32.xlu0 %v161, 40
      %v418 = vpop.permute.xlu0 %417
      %v420 = vsel %vm164, %v416, 0
      %v423 = vsel %vm214, %v418, 0
      %425 = vmatpush.bf16.msra.mxu0 0
      %426 = vmatpush.bf16.msra.mxu0 0
      %427 = vmatpush.bf16.msra.mxu0 0
      %428 = vmatpush.bf16.msra.mxu0 0
      %429 = vmatpush.bf16.msra.mxu0 0
      %430 = vmatpush.bf16.msra.mxu0 0
      %431 = vmatpush.bf16.msra.mxu0 0
      %432 = vmatpush.bf16.msra.mxu0 %v423
      %433 = vmatmul.bf16.gmra.mxu0 %v420
      %v434 = vpop.f32.mrf.mxu0
      %v435 = vadd.f32 0.0, %v434
      %v436 = vpop.f32.mrf.mxu0
      %437 = vdwg.mxu0
      %439 = vrot.lane.b32.xlu0 %v297, 8
      %v440 = vpop.permute.xlu0 %439
      %443 = vrot.lane.b32.xlu0 %v366, 16
      %v444 = vpop.permute.xlu0 %443
      %447 = vrot.lane.b32.xlu0 %v435, 24
      %v448 = vpop.permute.xlu0 %447
      %v450 = vsel %vm164, %v228, %v440
      %vm451 = vcmask 130048
      %v452 = vsel %vm451, %v450, %v444
      %vm453 = vcmask 195584
      %v454 = vsel %vm453, %v452, %v448
      %v455 = vpack.c.bf16 %v454, %v454
      %vm456 = vcmask 257024
      %457 = vst.msk [vmem:[%s152] sm:$0xf] %vm456, %v455
      %p458 = scmp.lt.s32.totalorder %s13, 1
      %s459 = scalar_select %p458, %s13, 1
      %s460 = smul.addr %s459, 4
      %s461 = scalar_lea.vmem %s2, %s460
      // Predicated region
      $region29: #{encoder_forward.12} parent=27 // pred_check
        %p462 = pneg %p83
      $region30: #{encoder_forward.12} parent=27 // pred_check_branch
        %464 = sbr.rel (%p462) target = $region32
      $region31: #{encoder_forward.12} parent=27 // pred_region
        _
      $region32: #{encoder_forward.12} parent=27 // pred_fallthru
        _
    $region28: #{encoder_forward.12} parent=5 // pred_fallthru
      _
    %p465 = scmp.le.s32.totalorder 2, %s8
    // Predicated region
    $region33: #{encoder_forward.12} parent=5 // pred_check
      %p466 = pneg %p465
    $region34: #{encoder_forward.12} parent=5 // pred_check_branch
      %468 = sbr.rel (%p466) target = $region36
    $region35: #{encoder_forward.12} parent=5 // pred_region
      %s469 = ssub.s32 %s8, 2
      // Predicated region
      $region37: #{encoder_forward.12} parent=35 // pred_check
        %p470 = pneg %p89
      $region38: #{encoder_forward.12} parent=35 // pred_check_branch
        %472 = sbr.rel (%p470) target = $region40
      $region39: #{encoder_forward.12} parent=35 // pred_region
        %p473 = scmp.lt.s32.totalorder %s14, 1
        %s474 = scalar_select %p473, %s14, 1
        %s475 = smul.addr %s474, 4
        %s476 = scalar_lea.vmem %s2, %s475
      $region40: #{encoder_forward.12} parent=35 // pred_fallthru
        _
    $region36: #{encoder_forward.12} parent=5 // pred_fallthru
      _
  $region6: #{encoder_forward.12} parent=0 // loop_footer
    %s12 = sadd.s32 1, %s8
  $region7: #{encoder_forward.12} parent=0 // loop_footer_branch
    %7 = sbr.rel target = $region3
  $region8: #{encoder_forward.12} parent=0 // loop_exit
    _

// kernel: encoder_forward.15
$region0: #{encoder_forward.15}
  #allocation0 [shape = 'u32[]', space=smem, size = 0x4, offset = 0x4, fixed_abs, tag = 'smem constant byte address 0x4 - core index']
  #allocation1 [shape = 'u32[72,128]{1,0:T(1,128)}', space=vmem, size = 0x9000, scoped, tag = 'internal scratch']
  %s0 = inlined_call_operand.vmem [shape: f32[16,32], index: 0, kind: input, shape index: {}]
  %s1 = inlined_call_operand.vmem [shape: bf16[32,96], index: 1, kind: input, shape index: {}]
  %s2 = inlined_call_operand.hbm [shape: f32[1,96], index: 2, kind: input, shape index: {}]
  %s3 = inlined_call_operand.vmem [shape: bf16[16,96], index: 3, kind: output, shape index: {}]
  %s4 = sld [smem:[#allocation0]]
  $region26: #{encoder_forward.15} parent=0
    _
  %s6 = ssub.s32 1, %s4
  %s7 = scalar_select 0, %s6, %s4
  $region1: #{encoder_forward.15} parent=0
    #allocation2 [shape = 'u8[512]{0}', space=vmem, size = 0x400, scoped, tag = 'input window, operand 2, single buffered']
    #allocation3 [shape = 's32[1]{0}', space=sflag, size = 0x4, scoped, tag = 'scoped memory for encoder_forward.15']
    %8 = vsyncpa [#allocation3], 0
    // Predicated region
    $region2: #{encoder_forward.15} parent=1 // pred_check
      _
    $region3: #{encoder_forward.15} parent=1 // pred_check_branch
      %10 = sbr.rel (0) target = $region5
    $region4: #{encoder_forward.15} parent=1 // pred_region
      _
    $region5: #{encoder_forward.15} parent=1 // pred_fallthru
      _
    // Predicated region
    $region6: #{encoder_forward.15} parent=1 // pred_check
      _
    $region7: #{encoder_forward.15} parent=1 // pred_check_branch
      %12 = sbr.rel (0) target = $region9
    $region8: #{encoder_forward.15} parent=1 // pred_region
      _
    $region9: #{encoder_forward.15} parent=1 // pred_fallthru
      _
    // Predicated region
    $region10: #{encoder_forward.15} parent=1 // pred_check
      _
    $region11: #{encoder_forward.15} parent=1 // pred_check_branch
      %14 = sbr.rel (0) target = $region13
    $region12: #{encoder_forward.15} parent=1 // pred_region
      %16 = vsyncadd [#allocation3], 0
      %s18 = sshll.u32 %s2, 4
      %s19 = int_to_ptr.hbm [resolvable:$true] %s18
      %s20 = sshll.u32 [#allocation2], 4
      %s21 = int_to_ptr.vmem [resolvable:$true] %s20
      %23 = dma.hbm_to_vmem [thread:$0]  %s19, 16, %s21, [#allocation3]
    $region13: #{encoder_forward.15} parent=1 // pred_fallthru
      _
    // Predicated region
    $region14: #{encoder_forward.15} parent=1 // pred_check
      _
    $region15: #{encoder_forward.15} parent=1 // pred_check_branch
      %25 = sbr.rel (0) target = $region17
    $region16: #{encoder_forward.15} parent=1 // pred_region
      %27 = dma.done [#allocation3], 16
    $region17: #{encoder_forward.15} parent=1 // pred_fallthru
      _
    %v29 = vld [vmem:[%s0] sm:$0xff]
    %v30 = vld [vmem:[%s0 + $0x8] sm:$0xff]
    %v31 = vpack.c.bf16 %v30, %v29
    %v32 = vld [vmem:[%s1] sm:$0xf]
    %v33 = vld [vmem:[%s1 + $0x4] sm:$0xf]
    %v34 = vld [vmem:[%s1 + $0x8] sm:$0xf]
    %v35 = vld [vmem:[%s1 + $0xc] sm:$0xf]
    %v36 = vld [vmem:[#allocation2] sm:$0x1]
    %v38 = vperm.slane %v36, 0
    %v44 = vunpack.c.l.b16 %v32
    %v45 = vunpack.c.l.b16 %v33
    %v46 = vunpack.c.l.b16 %v34
    %v47 = vunpack.c.l.b16 %v35
    %v48 = vpack.c.b16 %v45, %v44
    %v49 = vpack.c.b16 %v47, %v46
    %vm52 = vcmask 261120
    %v54 = vsel %vm52, %v31, 0
    %56 = vmatpush.bf16.msra.mxu0 0
    %57 = vmatpush.bf16.msra.mxu0 0
    %58 = vmatpush.bf16.msra.mxu0 0
    %59 = vmatpush.bf16.msra.mxu0 0
    %60 = vmatpush.bf16.msra.mxu0 0
    %61 = vmatpush.bf16.msra.mxu0 0
    %62 = vmatpush.bf16.msra.mxu0 %v49
    %63 = vmatpush.bf16.msra.mxu0 %v48
    %64 = vmatmul.bf16.gmra.mxu0 %v54
    %v65 = vpop.f32.mrf.mxu0
    %v66 = vadd.f32 %v38, %v65
    %v67 = vpop.f32.mrf.mxu0
    %v68 = vadd.f32 %v38, %v67
    %69 = vdwg.mxu0
    %v70 = vpack.c.bf16 %v66, %v66
    %v71 = vpack.c.bf16 %v68, %v68
    %vm72 = vcmask 781312
    %73 = vst.msk [vmem:[%s3] sm:$0xf] %vm72, %v70
    %74 = vst.msk [vmem:[%s3 + $0x4] sm:$0xf] %vm72, %v71
    // Predicated region
    $region18: #{encoder_forward.15} parent=1 // pred_check
      _
    $region19: #{encoder_forward.15} parent=1 // pred_check_branch
      %76 = sbr.rel (0) target = $region21
    $region20: #{encoder_forward.15} parent=1 // pred_region
      _
    $region21: #{encoder_forward.15} parent=1 // pred_fallthru
      _
    // Predicated region
    $region22: #{encoder_forward.15} parent=1 // pred_check
      _
    $region23: #{encoder_forward.15} parent=1 // pred_check_branch
      %78 = sbr.rel (0) target = $region25
    $region24: #{encoder_forward.15} parent=1 // pred_region
      _
    $region25: #{encoder_forward.15} parent=1 // pred_fallthru
      _
    %79 = vsyncpa [#allocation3], 1

// kernel: encoder_forward.14
$region0: #{encoder_forward.14}
  #allocation0 [shape = 'u32[]', space=smem, size = 0x4, offset = 0x4, fixed_abs, tag = 'smem constant byte address 0x4 - core index']
  #allocation1 [shape = 'u32[72,128]{1,0:T(1,128)}', space=vmem, size = 0x9000, scoped, tag = 'internal scratch']
  %s0 = inlined_call_operand.vmem [shape: f32[16,32], index: 0, kind: input, shape index: {}]
  %s1 = inlined_call_operand.vmem [shape: bf16[32,64], index: 1, kind: input, shape index: {}]
  %s2 = inlined_call_operand.hbm [shape: f32[1,64], index: 2, kind: input, shape index: {}]
  %s3 = inlined_call_operand.vmem [shape: bf16[64,32], index: 3, kind: input, shape index: {}]
  %s4 = inlined_call_operand.hbm [shape: f32[1,32], index: 4, kind: input, shape index: {}]
  %s5 = inlined_call_operand.hbm [shape: f32[1,32], index: 5, kind: input, shape index: {}]
  %s6 = inlined_call_operand.hbm [shape: f32[1,32], index: 6, kind: input, shape index: {}]
  %s7 = inlined_call_operand.vmem [shape: f32[16,32], index: 7, kind: output, shape index: {}]
  %s8 = sld [smem:[#allocation0]]
  $region54: #{encoder_forward.14} parent=0
    _
  %s10 = ssub.s32 1, %s8
  %s11 = scalar_select 0, %s10, %s8
  $region1: #{encoder_forward.14} parent=0
    #allocation2 [shape = 'u8[512]{0}', space=vmem, size = 0x400, scoped, tag = 'input window, operand 2, single buffered']
    #allocation3 [shape = 's32[1]{0}', space=sflag, size = 0x4, scoped, tag = 'scoped memory for encoder_forward.14']
    #allocation4 [shape = 'u8[512]{0}', space=vmem, size = 0x400, scoped, tag = 'input window, operand 4, single buffered']
    #allocation5 [shape = 's32[1]{0}', space=sflag, size = 0x4, scoped, tag = 'scoped memory for encoder_forward.14']
    #allocation6 [shape = 'u8[512]{0}', space=vmem, size = 0x400, scoped, tag = 'input window, operand 5, single buffered']
    #allocation7 [shape = 'u8[512]{0}', space=vmem, size = 0x400, scoped, tag = 'input window, operand 6, single buffered']
    #allocation8 [shape = 's32[1]{0}', space=sflag, size = 0x4, scoped, tag = 'scoped memory for encoder_forward.14']
    %12 = vsyncpa [#allocation3], 0
    %13 = vsyncpa [#allocation5], 0
    %14 = vsyncpa [#allocation8], 0
    // Predicated region
    $region2: #{encoder_forward.14} parent=1 // pred_check
      _
    $region3: #{encoder_forward.14} parent=1 // pred_check_branch
      %16 = sbr.rel (0) target = $region5
    $region4: #{encoder_forward.14} parent=1 // pred_region
      _
    $region5: #{encoder_forward.14} parent=1 // pred_fallthru
      _
    // Predicated region
    $region6: #{encoder_forward.14} parent=1 // pred_check
      _
    $region7: #{encoder_forward.14} parent=1 // pred_check_branch
      %18 = sbr.rel (0) target = $region9
    $region8: #{encoder_forward.14} parent=1 // pred_region
      _
    $region9: #{encoder_forward.14} parent=1 // pred_fallthru
      _
    // Predicated region
    $region10: #{encoder_forward.14} parent=1 // pred_check
      _
    $region11: #{encoder_forward.14} parent=1 // pred_check_branch
      %20 = sbr.rel (0) target = $region13
    $region12: #{encoder_forward.14} parent=1 // pred_region
      %22 = vsyncadd [#allocation3], 0
      %s24 = sshll.u32 %s2, 4
      %s25 = int_to_ptr.hbm [resolvable:$true] %s24
      %s26 = sshll.u32 [#allocation2], 4
      %s27 = int_to_ptr.vmem [resolvable:$true] %s26
      %29 = dma.hbm_to_vmem [thread:$0]  %s25, 16, %s27, [#allocation3]
    $region13: #{encoder_forward.14} parent=1 // pred_fallthru
      _
    // Predicated region
    $region14: #{encoder_forward.14} parent=1 // pred_check
      _
    $region15: #{encoder_forward.14} parent=1 // pred_check_branch
      %31 = sbr.rel (0) target = $region17
    $region16: #{encoder_forward.14} parent=1 // pred_region
      _
    $region17: #{encoder_forward.14} parent=1 // pred_fallthru
      _
    // Predicated region
    $region18: #{encoder_forward.14} parent=1 // pred_check
      _
    $region19: #{encoder_forward.14} parent=1 // pred_check_branch
      %33 = sbr.rel (0) target = $region21
    $region20: #{encoder_forward.14} parent=1 // pred_region
      %35 = vsyncadd [#allocation5], 0
      %s37 = sshll.u32 %s4, 4
      %s38 = int_to_ptr.hbm [resolvable:$true] %s37
      %s39 = sshll.u32 [#allocation4], 4
      %s40 = int_to_ptr.vmem [resolvable:$true] %s39
      %42 = dma.hbm_to_vmem [thread:$0]  %s38, 16, %s40, [#allocation5]
    $region21: #{encoder_forward.14} parent=1 // pred_fallthru
      _
    // Predicated region
    $region22: #{encoder_forward.14} parent=1 // pred_check
      _
    $region23: #{encoder_forward.14} parent=1 // pred_check_branch
      %44 = sbr.rel (0) target = $region25
    $region24: #{encoder_forward.14} parent=1 // pred_region
      %46 = vsyncadd [#allocation5], 0
      %s48 = sshll.u32 %s5, 4
      %s49 = int_to_ptr.hbm [resolvable:$true] %s48
      %s50 = sshll.u32 [#allocation6], 4
      %s51 = int_to_ptr.vmem [resolvable:$true] %s50
      %53 = dma.hbm_to_vmem [thread:$0]  %s49, 16, %s51, [#allocation5]
    $region25: #{encoder_forward.14} parent=1 // pred_fallthru
      _
    // Predicated region
    $region26: #{encoder_forward.14} parent=1 // pred_check
      _
    $region27: #{encoder_forward.14} parent=1 // pred_check_branch
      %55 = sbr.rel (0) target = $region29
    $region28: #{encoder_forward.14} parent=1 // pred_region
      %57 = vsyncadd [#allocation8], 0
      %s59 = sshll.u32 %s6, 4
      %s60 = int_to_ptr.hbm [resolvable:$true] %s59
      %s61 = sshll.u32 [#allocation7], 4
      %s62 = int_to_ptr.vmem [resolvable:$true] %s61
      %64 = dma.hbm_to_vmem [thread:$0]  %s60, 16, %s62, [#allocation8]
    $region29: #{encoder_forward.14} parent=1 // pred_fallthru
      _
    // Predicated region
    $region30: #{encoder_forward.14} parent=1 // pred_check
      _
    $region31: #{encoder_forward.14} parent=1 // pred_check_branch
      %66 = sbr.rel (0) target = $region33
    $region32: #{encoder_forward.14} parent=1 // pred_region
      %68 = dma.done [#allocation3], 16
    $region33: #{encoder_forward.14} parent=1 // pred_fallthru
      _
    // Predicated region
    $region34: #{encoder_forward.14} parent=1 // pred_check
      _
    $region35: #{encoder_forward.14} parent=1 // pred_check_branch
      %70 = sbr.rel (0) target = $region37
    $region36: #{encoder_forward.14} parent=1 // pred_region
      %72 = dma.done [#allocation5], 16
    $region37: #{encoder_forward.14} parent=1 // pred_fallthru
      _
    // Predicated region
    $region38: #{encoder_forward.14} parent=1 // pred_check
      _
    $region39: #{encoder_forward.14} parent=1 // pred_check_branch
      %74 = sbr.rel (0) target = $region41
    $region40: #{encoder_forward.14} parent=1 // pred_region
      %76 = dma.done [#allocation5], 16
    $region41: #{encoder_forward.14} parent=1 // pred_fallthru
      _
    // Predicated region
    $region42: #{encoder_forward.14} parent=1 // pred_check
      _
    $region43: #{encoder_forward.14} parent=1 // pred_check_branch
      %78 = sbr.rel (0) target = $region45
    $region44: #{encoder_forward.14} parent=1 // pred_region
      %80 = dma.done [#allocation8], 16
    $region45: #{encoder_forward.14} parent=1 // pred_fallthru
      _
    %v82 = vld [vmem:[%s0] sm:$0xff]
    %v83 = vld [vmem:[%s0 + $0x8] sm:$0xff]
    %v84 = vpack.c.bf16 %v83, %v82
    %v85 = vld [vmem:[%s1] sm:$0xf]
    %v86 = vld [vmem:[%s1 + $0x4] sm:$0xf]
    %v87 = vld [vmem:[%s1 + $0x8] sm:$0xf]
    %v88 = vld [vmem:[%s1 + $0xc] sm:$0xf]
    %v89 = vld [vmem:[#allocation2] sm:$0x1]
    %v91 = vperm.slane %v89, 0
    %v97 = vunpack.c.l.b16 %v85
    %v98 = vunpack.c.l.b16 %v86
    %v99 = vunpack.c.l.b16 %v87
    %v100 = vunpack.c.l.b16 %v88
    %v101 = vpack.c.b16 %v98, %v97
    %v102 = vpack.c.b16 %v100, %v99
    %vm105 = vcmask 261120
    %v107 = vsel %vm105, %v84, 0
    %109 = vmatpush.bf16.msra.mxu0 0
    %110 = vmatpush.bf16.msra.mxu0 0
    %111 = vmatpush.bf16.msra.mxu0 0
    %112 = vmatpush.bf16.msra.mxu0 0
    %113 = vmatpush.bf16.msra.mxu0 0
    %114 = vmatpush.bf16.msra.mxu0 0
    %115 = vmatpush.bf16.msra.mxu0 %v102
    %116 = vmatpush.bf16.msra.mxu0 %v101
    %117 = vmatmul.bf16.gmra.mxu0 %v107
    %v118 = vpop.f32.mrf.mxu0
    %v119 = vadd.f32 %v91, %v118
    %v120 = vpop.f32.mrf.mxu0
    %v121 = vadd.f32 %v91, %v120
    %122 = vdwg.mxu0
    %v123 = vmax.f32 %v119, 0.0
    %v124 = vmax.f32 %v121, 0.0
    %v125 = vpack.c.bf16 %v124, %v123
    %v126 = vld [vmem:[%s3] sm:$0xf]
    %v127 = vld [vmem:[%s3 + $0x4] sm:$0xf]
    %v128 = vld [vmem:[%s3 + $0x8] sm:$0xf]
    %v129 = vld [vmem:[%s3 + $0xc] sm:$0xf]
    %v130 = vld [vmem:[%s3 + $0x10] sm:$0xf]
    %v131 = vld [vmem:[%s3 + $0x14] sm:$0xf]
    %v132 = vld [vmem:[%s3 + $0x18] sm:$0xf]
    %v133 = vld [vmem:[%s3 + $0x1c] sm:$0xf]
    %v134 = vld [vmem:[#allocation4] sm:$0x1]
    %v136 = vperm.slane %v134, 0
    %v146 = vunpack.c.l.b16 %v126
    %v147 = vunpack.c.l.b16 %v127
    %v148 = vunpack.c.l.b16 %v128
    %v149 = vunpack.c.l.b16 %v129
    %v150 = vunpack.c.l.b16 %v130
    %v151 = vunpack.c.l.b16 %v131
    %v152 = vunpack.c.l.b16 %v132
    %v153 = vunpack.c.l.b16 %v133
    %v154 = vpack.c.b16 %v147, %v146
    %v155 = vpack.c.b16 %v149, %v148
    %v156 = vpack.c.b16 %v151, %v150
    %v157 = vpack.c.b16 %v153, %v152
    %vm162 = vcmask 523264
    %v164 = vsel %vm162, %v125, 0
    %166 = vmatpush.bf16.msra.mxu0 0
    %167 = vmatpush.bf16.msra.mxu0 0
    %168 = vmatpush.bf16.msra.mxu0 0
    %169 = vmatpush.bf16.msra.mxu0 0
    %170 = vmatpush.bf16.msra.mxu0 %v157
    %171 = vmatpush.bf16.msra.mxu0 %v156
    %172 = vmatpush.bf16.msra.mxu0 %v155
    %173 = vmatpush.bf16.msra.mxu0 %v154
    %174 = vmatmul.bf16.gmra.mxu0 %v164
    %v175 = vpop.f32.mrf.mxu0
    %v176 = vadd.f32 %v136, %v175
    %v177 = vpop.f32.mrf.mxu0
    %v178 = vadd.f32 %v136, %v177
    %179 = vdwg.mxu0
    %v180 = vadd.f32 %v176, %v82
    %v181 = vadd.f32 %v178, %v83
    %v182 = vsel %vm105, %v180, 0.0
    %183 = vadd.xlane.f32.xlu0 %v182
    %v184 = vpop.xlane.xlu0 %183
    %v185 = vsel %vm105, %v181, 0.0
    %186 = vadd.xlane.f32.xlu0 %v185
    %v187 = vpop.xlane.xlu0 %186
    %v188 = vrcp.pop 32.0
    %v189 = vmul.f32 32.0, %v188
    %v190 = vsub.f32 1.0, %v189
    %v191 = vmul.f32 %v188, %v190
    %v192 = vadd.f32 %v188, %v191
    %vm193 = vweird.f32 %v188
    %v194 = vsel %vm193, %v188, %v192
    %v195 = vmul.f32 %v184, %v194
    %v196 = vmul.f32 %v187, %v194
    %v197 = vsub.f32 %v180, %v195
    %v198 = vsub.f32 %v181, %v196
    %v199 = vmul.f32 %v197, %v197
    %v200 = vmul.f32 %v198, %v198
    %v201 = vsel %vm105, %v199, 0.0
    %202 = vadd.xlane.f32.xlu0 %v201
    %v203 = vpop.xlane.xlu0 %202
    %v204 = vsel %vm105, %v200, 0.0
    %205 = vadd.xlane.f32.xlu0 %v204
    %v206 = vpop.xlane.xlu0 %205
    %v207 = vmul.f32 %v203, %v194
    %v208 = vmul.f32 %v206, %v194
    %v209 = vadd.f32 %v207, 1e-05
    %v210 = vadd.f32 %v208, 1e-05
    %v211 = vrsqrt.pop %v209
    %v212 = vmul.f32 %v211, %v209
    %v213 = vmul.f32 %v212, %v211
    %v214 = vmul.f32 0.5, %v213
    %v215 = vsub.f32 1.5, %v214
    %v216 = vmul.f32 %v211, %v215
    %vm217 = vweird.f32 %v209
    %vm218 = vweird.f32 %v211
    %vm219 = vmor %vm217, %vm218
    %v220 = vsel %vm219, %v211, %v216
    %v221 = vrsqrt.pop %v210
    %v222 = vmul.f32 %v221, %v210
    %v223 = vmul.f32 %v222, %v221
    %v224 = vmul.f32 0.5, %v223
    %v225 = vsub.f32 1.5, %v224
    %v226 = vmul.f32 %v221, %v225
    %vm227 = vweird.f32 %v210
    %vm228 = vweird.f32 %v221
    %vm229 = vmor %vm227, %vm228
    %v230 = vsel %vm229, %v221, %v226
    %v231 = vmul.f32 %v197, %v220
    %v232 = vmul.f32 %v198, %v230
    %v233 = vld [vmem:[#allocation6] sm:$0x1]
    %v235 = vperm.slane %v233, 0
    %v237 = vmul.f32 %v231, %v235
    %v238 = vmul.f32 %v232, %v235
    %v239 = vld [vmem:[#allocation7] sm:$0x1]
    %v241 = vperm.slane %v239, 0
    %v243 = vadd.f32 %v237, %v241
    %v244 = vadd.f32 %v238, %v241
    %245 = vst.msk [vmem:[%s7] sm:$0xff] %vm105, %v243
    %246 = vst.msk [vmem:[%s7 + $0x8] sm:$0xff] %vm105, %v244
    // Predicated region
    $region46: #{encoder_forward.14} parent=1 // pred_check
      _
    $region47: #{encoder_forward.14} parent=1 // pred_check_branch
      %248 = sbr.rel (0) target = $region49
    $region48: #{encoder_forward.14} parent=1 // pred_region
      _
    $region49: #{encoder_forward.14} parent=1 // pred_fallthru
      _
    // Predicated region
    $region50: #{encoder_forward.14} parent=1 // pred_check
      _
    $region51: #{encoder_forward.14} parent=1 // pred_check_branch
      %250 = sbr.rel (0) target = $region53
    $region52: #{encoder_forward.14} parent=1 // pred_region
      _
    $region53: #{encoder_forward.14} parent=1 // pred_fallthru
      _
    %251 = vsyncpa [#allocation3], 1
    %252 = vsyncpa [#allocation5], 1
    %253 = vsyncpa [#allocation8], 1

// kernel: encoder_forward.17
$region0: #{encoder_forward.17}
  #allocation0 [shape = 'u32[]', space=smem, size = 0x4, offset = 0x4, fixed_abs, tag = 'smem constant byte address 0x4 - core index']
  #allocation1 [shape = 'u32[72,128]{1,0:T(1,128)}', space=vmem, size = 0x9000, scoped, tag = 'internal scratch']
  %s0 = inlined_call_operand.vmem [shape: bf16[16,32], index: 0, kind: input, shape index: {}]
  %s1 = inlined_call_operand.vmem [shape: bf16[32,32], index: 1, kind: input, shape index: {}]
  %s2 = inlined_call_operand.vmem [shape: f32[1,32], index: 2, kind: input, shape index: {}]
  %s3 = inlined_call_operand.vmem [shape: f32[16,32], index: 3, kind: input, shape index: {}]
  %s4 = inlined_call_operand.vmem [shape: f32[1,32], index: 4, kind: input, shape index: {}]
  %s5 = inlined_call_operand.vmem [shape: f32[1,32], index: 5, kind: input, shape index: {}]
  %s6 = inlined_call_operand.vmem [shape: f32[16,32], index: 6, kind: output, shape index: {}]
  %s7 = sld [smem:[#allocation0]]
  $region34: #{encoder_forward.17} parent=0
    _
  %s9 = ssub.s32 1, %s7
  %s10 = scalar_select 0, %s9, %s7
  // Predicated region
  $region2: #{encoder_forward.17} parent=0 // pred_check
    _
  $region3: #{encoder_forward.17} parent=0 // pred_check_branch
    %12 = sbr.rel (0) target = $region5
  $region4: #{encoder_forward.17} parent=0 // pred_region
    _
  $region5: #{encoder_forward.17} parent=0 // pred_fallthru
    _
  // Predicated region
  $region6: #{encoder_forward.17} parent=0 // pred_check
    _
  $region7: #{encoder_forward.17} parent=0 // pred_check_branch
    %14 = sbr.rel (0) target = $region9
  $region8: #{encoder_forward.17} parent=0 // pred_region
    _
  $region9: #{encoder_forward.17} parent=0 // pred_fallthru
    _
  // Predicated region
  $region10: #{encoder_forward.17} parent=0 // pred_check
    _
  $region11: #{encoder_forward.17} parent=0 // pred_check_branch
    %16 = sbr.rel (0) target = $region13
  $region12: #{encoder_forward.17} parent=0 // pred_region
    _
  $region13: #{encoder_forward.17} parent=0 // pred_fallthru
    _
  // Predicated region
  $region14: #{encoder_forward.17} parent=0 // pred_check
    _
  $region15: #{encoder_forward.17} parent=0 // pred_check_branch
    %18 = sbr.rel (0) target = $region17
  $region16: #{encoder_forward.17} parent=0 // pred_region
    _
  $region17: #{encoder_forward.17} parent=0 // pred_fallthru
    _
  // Predicated region
  $region18: #{encoder_forward.17} parent=0 // pred_check
    _
  $region19: #{encoder_forward.17} parent=0 // pred_check_branch
    %20 = sbr.rel (0) target = $region21
  $region20: #{encoder_forward.17} parent=0 // pred_region
    _
  $region21: #{encoder_forward.17} parent=0 // pred_fallthru
    _
  // Predicated region
  $region22: #{encoder_forward.17} parent=0 // pred_check
    _
  $region23: #{encoder_forward.17} parent=0 // pred_check_branch
    %22 = sbr.rel (0) target = $region25
  $region24: #{encoder_forward.17} parent=0 // pred_region
    _
  $region25: #{encoder_forward.17} parent=0 // pred_fallthru
    _
  %v24 = vld [vmem:[%s0] sm:$0xf]
  %v25 = vld [vmem:[%s0 + $0x4] sm:$0xf]
  %v26 = vld [vmem:[%s1] sm:$0xf]
  %v27 = vld [vmem:[%s1 + $0x4] sm:$0xf]
  %v28 = vld [vmem:[%s1 + $0x8] sm:$0xf]
  %v29 = vld [vmem:[%s1 + $0xc] sm:$0xf]
  %v30 = vld [vmem:[%s2] sm:$0x1]
  %v32 = vperm.slane %v30, 0
  %v36 = vunpack.c.l.b16 %v24
  %v37 = vunpack.c.l.b16 %v25
  %v38 = vpack.c.b16 %v37, %v36
  %v43 = vunpack.c.l.b16 %v26
  %v44 = vunpack.c.l.b16 %v27
  %v45 = vunpack.c.l.b16 %v28
  %v46 = vunpack.c.l.b16 %v29
  %v47 = vpack.c.b16 %v44, %v43
  %v48 = vpack.c.b16 %v46, %v45
  %vm51 = vcmask 261120
  %v53 = vsel %vm51, %v38, 0
  %55 = vmatpush.bf16.msra.mxu0 0
  %56 = vmatpush.bf16.msra.mxu0 0
  %57 = vmatpush.bf16.msra.mxu0 0
  %58 = vmatpush.bf16.msra.mxu0 0
  %59 = vmatpush.bf16.msra.mxu0 0
  %60 = vmatpush.bf16.msra.mxu0 0
  %61 = vmatpush.bf16.msra.mxu0 %v48
  %62 = vmatpush.bf16.msra.mxu0 %v47
  %63 = vmatmul.bf16.gmra.mxu0 %v53
  %v64 = vpop.f32.mrf.mxu0
  %v65 = vadd.f32 %v32, %v64
  %v66 = vpop.f32.mrf.mxu0
  %v67 = vadd.f32 %v32, %v66
  %68 = vdwg.mxu0
  %v69 = vld [vmem:[%s3] sm:$0xff]
  %v70 = vld [vmem:[%s3 + $0x8] sm:$0xff]
  %v71 = vadd.f32 %v65, %v69
  %v72 = vadd.f32 %v67, %v70
  %v73 = vsel %vm51, %v71, 0.0
  %74 = vadd.xlane.f32.xlu0 %v73
  %v75 = vpop.xlane.xlu0 %74
  %v76 = vsel %vm51, %v72, 0.0
  %77 = vadd.xlane.f32.xlu0 %v76
  %v78 = vpop.xlane.xlu0 %77
  %v79 = vrcp.pop 32.0
  %v80 = vmul.f32 32.0, %v79
  %v81 = vsub.f32 1.0, %v80
  %v82 = vmul.f32 %v79, %v81
  %v83 = vadd.f32 %v79, %v82
  %vm84 = vweird.f32 %v79
  %v85 = vsel %vm84, %v79, %v83
  %v86 = vmul.f32 %v75, %v85
  %v87 = vmul.f32 %v78, %v85
  %v88 = vsub.f32 %v71, %v86
  %v89 = vsub.f32 %v72, %v87
  %v90 = vmul.f32 %v88, %v88
  %v91 = vmul.f32 %v89, %v89
  %v92 = vsel %vm51, %v90, 0.0
  %93 = vadd.xlane.f32.xlu0 %v92
  %v94 = vpop.xlane.xlu0 %93
  %v95 = vsel %vm51, %v91, 0.0
  %96 = vadd.xlane.f32.xlu0 %v95
  %v97 = vpop.xlane.xlu0 %96
  %v98 = vmul.f32 %v94, %v85
  %v99 = vmul.f32 %v97, %v85
  %v100 = vadd.f32 %v98, 1e-05
  %v101 = vadd.f32 %v99, 1e-05
  %v102 = vrsqrt.pop %v100
  %v103 = vmul.f32 %v102, %v100
  %v104 = vmul.f32 %v103, %v102
  %v105 = vmul.f32 0.5, %v104
  %v106 = vsub.f32 1.5, %v105
  %v107 = vmul.f32 %v102, %v106
  %vm108 = vweird.f32 %v100
  %vm109 = vweird.f32 %v102
  %vm110 = vmor %vm108, %vm109
  %v111 = vsel %vm110, %v102, %v107
  %v112 = vrsqrt.pop %v101
  %v113 = vmul.f32 %v112, %v101
  %v114 = vmul.f32 %v113, %v112
  %v115 = vmul.f32 0.5, %v114
  %v116 = vsub.f32 1.5, %v115
  %v117 = vmul.f32 %v112, %v116
  %vm118 = vweird.f32 %v101
  %vm119 = vweird.f32 %v112
  %vm120 = vmor %vm118, %vm119
  %v121 = vsel %vm120, %v112, %v117
  %v122 = vmul.f32 %v88, %v111
  %v123 = vmul.f32 %v89, %v121
  %v124 = vld [vmem:[%s4] sm:$0x1]
  %v126 = vperm.slane %v124, 0
  %v128 = vmul.f32 %v122, %v126
  %v129 = vmul.f32 %v123, %v126
  %v130 = vld [vmem:[%s5] sm:$0x1]
  %v132 = vperm.slane %v130, 0
  %v134 = vadd.f32 %v128, %v132
  %v135 = vadd.f32 %v129, %v132
  %136 = vst.msk [vmem:[%s6] sm:$0xff] %vm51, %v134
  %137 = vst.msk [vmem:[%s6 + $0x8] sm:$0xff] %vm51, %v135
  // Predicated region
  $region26: #{encoder_forward.17} parent=0 // pred_check
    _
  $region27: #{encoder_forward.17} parent=0 // pred_check_branch
    %139 = sbr.rel (0) target = $region29
  $region28: #{encoder_forward.17} parent=0 // pred_region
    _
  $region29: #{encoder_forward.17} parent=0 // pred_fallthru
    _
  // Predicated region
  $region30: #{encoder_forward.17} parent=0 // pred_check
    _
  $region31: #{encoder_forward.17} parent=0 // pred_check_branch
    %141 = sbr.rel (0) target = $region33
  $region32: #{encoder_forward.17} parent=0 // pred_region
    _
  $region33: #{encoder_forward.17} parent=0 // pred_fallthru
    _

// kernel: encoder_forward.18
$region0: #{encoder_forward.18}
  #allocation0 [shape = 'u32[]', space=smem, size = 0x4, offset = 0x4, fixed_abs, tag = 'smem constant byte address 0x4 - core index']
  #allocation1 [shape = 'u32[72,128]{1,0:T(1,128)}', space=vmem, size = 0x9000, scoped, tag = 'internal scratch']
  %s0 = inlined_call_operand.vmem [shape: f32[16,32], index: 0, kind: input, shape index: {}]
  %s1 = inlined_call_operand.vmem [shape: bf16[32,64], index: 1, kind: input, shape index: {}]
  %s2 = inlined_call_operand.vmem [shape: f32[1,64], index: 2, kind: input, shape index: {}]
  %s3 = inlined_call_operand.vmem [shape: bf16[64,32], index: 3, kind: input, shape index: {}]
  %s4 = inlined_call_operand.vmem [shape: f32[1,32], index: 4, kind: input, shape index: {}]
  %s5 = inlined_call_operand.vmem [shape: f32[1,32], index: 5, kind: input, shape index: {}]
  %s6 = inlined_call_operand.vmem [shape: f32[1,32], index: 6, kind: input, shape index: {}]
  %s7 = inlined_call_operand.vmem [shape: f32[16,32], index: 7, kind: output, shape index: {}]
  %s8 = sld [smem:[#allocation0]]
  $region38: #{encoder_forward.18} parent=0
    _
  %s10 = ssub.s32 1, %s8
  %s11 = scalar_select 0, %s10, %s8
  // Predicated region
  $region2: #{encoder_forward.18} parent=0 // pred_check
    _
  $region3: #{encoder_forward.18} parent=0 // pred_check_branch
    %13 = sbr.rel (0) target = $region5
  $region4: #{encoder_forward.18} parent=0 // pred_region
    _
  $region5: #{encoder_forward.18} parent=0 // pred_fallthru
    _
  // Predicated region
  $region6: #{encoder_forward.18} parent=0 // pred_check
    _
  $region7: #{encoder_forward.18} parent=0 // pred_check_branch
    %15 = sbr.rel (0) target = $region9
  $region8: #{encoder_forward.18} parent=0 // pred_region
    _
  $region9: #{encoder_forward.18} parent=0 // pred_fallthru
    _
  // Predicated region
  $region10: #{encoder_forward.18} parent=0 // pred_check
    _
  $region11: #{encoder_forward.18} parent=0 // pred_check_branch
    %17 = sbr.rel (0) target = $region13
  $region12: #{encoder_forward.18} parent=0 // pred_region
    _
  $region13: #{encoder_forward.18} parent=0 // pred_fallthru
    _
  // Predicated region
  $region14: #{encoder_forward.18} parent=0 // pred_check
    _
  $region15: #{encoder_forward.18} parent=0 // pred_check_branch
    %19 = sbr.rel (0) target = $region17
  $region16: #{encoder_forward.18} parent=0 // pred_region
    _
  $region17: #{encoder_forward.18} parent=0 // pred_fallthru
    _
  // Predicated region
  $region18: #{encoder_forward.18} parent=0 // pred_check
    _
  $region19: #{encoder_forward.18} parent=0 // pred_check_branch
    %21 = sbr.rel (0) target = $region21
  $region20: #{encoder_forward.18} parent=0 // pred_region
    _
  $region21: #{encoder_forward.18} parent=0 // pred_fallthru
    _
  // Predicated region
  $region22: #{encoder_forward.18} parent=0 // pred_check
    _
  $region23: #{encoder_forward.18} parent=0 // pred_check_branch
    %23 = sbr.rel (0) target = $region25
  $region24: #{encoder_forward.18} parent=0 // pred_region
    _
  $region25: #{encoder_forward.18} parent=0 // pred_fallthru
    _
  // Predicated region
  $region26: #{encoder_forward.18} parent=0 // pred_check
    _
  $region27: #{encoder_forward.18} parent=0 // pred_check_branch
    %25 = sbr.rel (0) target = $region29
  $region28: #{encoder_forward.18} parent=0 // pred_region
    _
  $region29: #{encoder_forward.18} parent=0 // pred_fallthru
    _
  %v27 = vld [vmem:[%s0] sm:$0xff]
  %v28 = vld [vmem:[%s0 + $0x8] sm:$0xff]
  %v29 = vpack.c.bf16 %v28, %v27
  %v30 = vld [vmem:[%s1] sm:$0xf]
  %v31 = vld [vmem:[%s1 + $0x4] sm:$0xf]
  %v32 = vld [vmem:[%s1 + $0x8] sm:$0xf]
  %v33 = vld [vmem:[%s1 + $0xc] sm:$0xf]
  %v34 = vld [vmem:[%s2] sm:$0x1]
  %v36 = vperm.slane %v34, 0
  %v42 = vunpack.c.l.b16 %v30
  %v43 = vunpack.c.l.b16 %v31
  %v44 = vunpack.c.l.b16 %v32
  %v45 = vunpack.c.l.b16 %v33
  %v46 = vpack.c.b16 %v43, %v42
  %v47 = vpack.c.b16 %v45, %v44
  %vm50 = vcmask 261120
  %v52 = vsel %vm50, %v29, 0
  %54 = vmatpush.bf16.msra.mxu0 0
  %55 = vmatpush.bf16.msra.mxu0 0
  %56 = vmatpush.bf16.msra.mxu0 0
  %57 = vmatpush.bf16.msra.mxu0 0
  %58 = vmatpush.bf16.msra.mxu0 0
  %59 = vmatpush.bf16.msra.mxu0 0
  %60 = vmatpush.bf16.msra.mxu0 %v47
  %61 = vmatpush.bf16.msra.mxu0 %v46
  %62 = vmatmul.bf16.gmra.mxu0 %v52
  %v63 = vpop.f32.mrf.mxu0
  %v64 = vadd.f32 %v36, %v63
  %v65 = vpop.f32.mrf.mxu0
  %v66 = vadd.f32 %v36, %v65
  %67 = vdwg.mxu0
  %v68 = vmax.f32 %v64, 0.0
  %v69 = vmax.f32 %v66, 0.0
  %v70 = vpack.c.bf16 %v69, %v68
  %v71 = vld [vmem:[%s3] sm:$0xf]
  %v72 = vld [vmem:[%s3 + $0x4] sm:$0xf]
  %v73 = vld [vmem:[%s3 + $0x8] sm:$0xf]
  %v74 = vld [vmem:[%s3 + $0xc] sm:$0xf]
  %v75 = vld [vmem:[%s3 + $0x10] sm:$0xf]
  %v76 = vld [vmem:[%s3 + $0x14] sm:$0xf]
  %v77 = vld [vmem:[%s3 + $0x18] sm:$0xf]
  %v78 = vld [vmem:[%s3 + $0x1c] sm:$0xf]
  %v79 = vld [vmem:[%s4] sm:$0x1]
  %v81 = vperm.slane %v79, 0
  %v91 = vunpack.c.l.b16 %v71
  %v92 = vunpack.c.l.b16 %v72
  %v93 = vunpack.c.l.b16 %v73
  %v94 = vunpack.c.l.b16 %v74
  %v95 = vunpack.c.l.b16 %v75
  %v96 = vunpack.c.l.b16 %v76
  %v97 = vunpack.c.l.b16 %v77
  %v98 = vunpack.c.l.b16 %v78
  %v99 = vpack.c.b16 %v92, %v91
  %v100 = vpack.c.b16 %v94, %v93
  %v101 = vpack.c.b16 %v96, %v95
  %v102 = vpack.c.b16 %v98, %v97
  %vm107 = vcmask 523264
  %v109 = vsel %vm107, %v70, 0
  %111 = vmatpush.bf16.msra.mxu0 0
  %112 = vmatpush.bf16.msra.mxu0 0
  %113 = vmatpush.bf16.msra.mxu0 0
  %114 = vmatpush.bf16.msra.mxu0 0
  %115 = vmatpush.bf16.msra.mxu0 %v102
  %116 = vmatpush.bf16.msra.mxu0 %v101
  %117 = vmatpush.bf16.msra.mxu0 %v100
  %118 = vmatpush.bf16.msra.mxu0 %v99
  %119 = vmatmul.bf16.gmra.mxu0 %v109
  %v120 = vpop.f32.mrf.mxu0
  %v121 = vadd.f32 %v81, %v120
  %v122 = vpop.f32.mrf.mxu0
  %v123 = vadd.f32 %v81, %v122
  %124 = vdwg.mxu0
  %v125 = vadd.f32 %v121, %v27
  %v126 = vadd.f32 %v123, %v28
  %v127 = vsel %vm50, %v125, 0.0
  %128 = vadd.xlane.f32.xlu0 %v127
  %v129 = vpop.xlane.xlu0 %128
  %v130 = vsel %vm50, %v126, 0.0
  %131 = vadd.xlane.f32.xlu0 %v130
  %v132 = vpop.xlane.xlu0 %131
  %v133 = vrcp.pop 32.0
  %v134 = vmul.f32 32.0, %v133
  %v135 = vsub.f32 1.0, %v134
  %v136 = vmul.f32 %v133, %v135
  %v137 = vadd.f32 %v133, %v136
  %vm138 = vweird.f32 %v133
  %v139 = vsel %vm138, %v133, %v137
  %v140 = vmul.f32 %v129, %v139
  %v141 = vmul.f32 %v132, %v139
  %v142 = vsub.f32 %v125, %v140
  %v143 = vsub.f32 %v126, %v141
  %v144 = vmul.f32 %v142, %v142
  %v145 = vmul.f32 %v143, %v143
  %v146 = vsel %vm50, %v144, 0.0
  %147 = vadd.xlane.f32.xlu0 %v146
  %v148 = vpop.xlane.xlu0 %147
  %v149 = vsel %vm50, %v145, 0.0
  %150 = vadd.xlane.f32.xlu0 %v149
  %v151 = vpop.xlane.xlu0 %150
  %v152 = vmul.f32 %v148, %v139
  %v153 = vmul.f32 %v151, %v139
  %v154 = vadd.f32 %v152, 1e-05
  %v155 = vadd.f32 %v153, 1e-05
  %v156 = vrsqrt.pop %v154
  %v157 = vmul.f32 %v156, %v154
  %v158 = vmul.f32 %v157, %v156
  %v159 = vmul.f32 0.5, %v158
  %v160 = vsub.f32 1.5, %v159
  %v161 = vmul.f32 %v156, %v160
  %vm162 = vweird.f32 %v154
  %vm163 = vweird.f32 %v156
  %vm164 = vmor %vm162, %vm163
  %v165 = vsel %vm164, %v156, %v161
  %v166 = vrsqrt.pop %v155
  %v167 = vmul.f32 %v166, %v155
  %v168 = vmul.f32 %v167, %v166
  %v169 = vmul.f32 0.5, %v168
  %v170 = vsub.f32 1.5, %v169
  %v171 = vmul.f32 %v166, %v170
  %vm172 = vweird.f32 %v155
  %vm173 = vweird.f32 %v166
  %vm174 = vmor %vm172, %vm173
  %v175 = vsel %vm174, %v166, %v171
  %v176 = vmul.f32 %v142, %v165
  %v177 = vmul.f32 %v143, %v175
  %v178 = vld [vmem:[%s5] sm:$0x1]
  %v180 = vperm.slane %v178, 0
  %v182 = vmul.f32 %v176, %v180
  %v183 = vmul.f32 %v177, %v180
  %v184 = vld [vmem:[%s6] sm:$0x1]
  %v186 = vperm.slane %v184, 0
  %v188 = vadd.f32 %v182, %v186
  %v189 = vadd.f32 %v183, %v186
  %190 = vst.msk [vmem:[%s7] sm:$0xff] %vm50, %v188
  %191 = vst.msk [vmem:[%s7 + $0x8] sm:$0xff] %vm50, %v189
  // Predicated region
  $region30: #{encoder_forward.18} parent=0 // pred_check
    _
  $region31: #{encoder_forward.18} parent=0 // pred_check_branch
    %193 = sbr.rel (0) target = $region33
  $region32: #{encoder_forward.18} parent=0 // pred_region
    _
  $region33: #{encoder_forward.18} parent=0 // pred_fallthru
    _
  // Predicated region
  $region34: #{encoder_forward.18} parent=0 // pred_check
    _
  $region35: #{encoder_forward.18} parent=0 // pred_check_branch
    %195 = sbr.rel (0) target = $region37
  $region36: #{encoder_forward.18} parent=0 // pred_region
    _
  $region37: #{encoder_forward.18} parent=0 // pred_fallthru
    _

// kernel: encoder_forward.19
$region0: #{encoder_forward.19}
  #allocation0 [shape = 'u32[]', space=smem, size = 0x4, offset = 0x4, fixed_abs, tag = 'smem constant byte address 0x4 - core index']
  #allocation1 [shape = 'u32[72,128]{1,0:T(1,128)}', space=vmem, size = 0x9000, scoped, tag = 'internal scratch']
  %s0 = inlined_call_operand.vmem [shape: f32[16,32], index: 0, kind: input, shape index: {}]
  %s1 = inlined_call_operand.vmem [shape: f32[1,32], index: 1, kind: input, shape index: {}]
  %s2 = inlined_call_operand.vmem [shape: f32[1,32], index: 2, kind: input, shape index: {}]
  %s3 = inlined_call_operand.vmem [shape: f32[16,32], index: 3, kind: output, shape index: {}]
  %s4 = sld [smem:[#allocation0]]
  $region22: #{encoder_forward.19} parent=0
    _
  %s6 = ssub.s32 1, %s4
  %s7 = scalar_select 0, %s6, %s4
  // Predicated region
  $region2: #{encoder_forward.19} parent=0 // pred_check
    _
  $region3: #{encoder_forward.19} parent=0 // pred_check_branch
    %9 = sbr.rel (0) target = $region5
  $region4: #{encoder_forward.19} parent=0 // pred_region
    _
  $region5: #{encoder_forward.19} parent=0 // pred_fallthru
    _
  // Predicated region
  $region6: #{encoder_forward.19} parent=0 // pred_check
    _
  $region7: #{encoder_forward.19} parent=0 // pred_check_branch
    %11 = sbr.rel (0) target = $region9
  $region8: #{encoder_forward.19} parent=0 // pred_region
    _
  $region9: #{encoder_forward.19} parent=0 // pred_fallthru
    _
  // Predicated region
  $region10: #{encoder_forward.19} parent=0 // pred_check
    _
  $region11: #{encoder_forward.19} parent=0 // pred_check_branch
    %13 = sbr.rel (0) target = $region13
  $region12: #{encoder_forward.19} parent=0 // pred_region
    _
  $region13: #{encoder_forward.19} parent=0 // pred_fallthru
    _
  %v14 = vld [vmem:[%s0] sm:$0xff]
  %v15 = vld [vmem:[%s0 + $0x8] sm:$0xff]
  %vm16 = vcmask 261120
  %v17 = vsel %vm16, %v14, 0.0
  %18 = vadd.xlane.f32.xlu0 %v17
  %v19 = vpop.xlane.xlu0 %18
  %v20 = vsel %vm16, %v15, 0.0
  %21 = vadd.xlane.f32.xlu0 %v20
  %v22 = vpop.xlane.xlu0 %21
  %v23 = vrcp.pop 32.0
  %v24 = vmul.f32 32.0, %v23
  %v25 = vsub.f32 1.0, %v24
  %v26 = vmul.f32 %v23, %v25
  %v27 = vadd.f32 %v23, %v26
  %vm28 = vweird.f32 %v23
  %v29 = vsel %vm28, %v23, %v27
  %v30 = vmul.f32 %v19, %v29
  %v31 = vmul.f32 %v22, %v29
  %v32 = vsub.f32 %v14, %v30
  %v33 = vsub.f32 %v15, %v31
  %v34 = vmul.f32 %v32, %v32
  %v35 = vmul.f32 %v33, %v33
  %v36 = vsel %vm16, %v34, 0.0
  %37 = vadd.xlane.f32.xlu0 %v36
  %v38 = vpop.xlane.xlu0 %37
  %v39 = vsel %vm16, %v35, 0.0
  %40 = vadd.xlane.f32.xlu0 %v39
  %v41 = vpop.xlane.xlu0 %40
  %v42 = vmul.f32 %v38, %v29
  %v43 = vmul.f32 %v41, %v29
  %v44 = vadd.f32 %v42, 1e-05
  %v45 = vadd.f32 %v43, 1e-05
  %v46 = vrsqrt.pop %v44
  %v47 = vmul.f32 %v46, %v44
  %v48 = vmul.f32 %v47, %v46
  %v49 = vmul.f32 0.5, %v48
  %v50 = vsub.f32 1.5, %v49
  %v51 = vmul.f32 %v46, %v50
  %vm52 = vweird.f32 %v44
  %vm53 = vweird.f32 %v46
  %vm54 = vmor %vm52, %vm53
  %v55 = vsel %vm54, %v46, %v51
  %v56 = vrsqrt.pop %v45
  %v57 = vmul.f32 %v56, %v45
  %v58 = vmul.f32 %v57, %v56
  %v59 = vmul.f32 0.5, %v58
  %v60 = vsub.f32 1.5, %v59
  %v61 = vmul.f32 %v56, %v60
  %vm62 = vweird.f32 %v45
  %vm63 = vweird.f32 %v56
  %vm64 = vmor %vm62, %vm63
  %v65 = vsel %vm64, %v56, %v61
  %v66 = vmul.f32 %v32, %v55
  %v67 = vmul.f32 %v33, %v65
  %v68 = vld [vmem:[%s1] sm:$0x1]
  %v70 = vperm.slane %v68, 0
  %v72 = vmul.f32 %v66, %v70
  %v73 = vmul.f32 %v67, %v70
  %v74 = vld [vmem:[%s2] sm:$0x1]
  %v76 = vperm.slane %v74, 0
  %v78 = vadd.f32 %v72, %v76
  %v79 = vadd.f32 %v73, %v76
  %80 = vst.msk [vmem:[%s3] sm:$0xff] %vm16, %v78
  %81 = vst.msk [vmem:[%s3 + $0x8] sm:$0xff] %vm16, %v79
  // Predicated region
  $region14: #{encoder_forward.19} parent=0 // pred_check
    _
  $region15: #{encoder_forward.19} parent=0 // pred_check_branch
    %83 = sbr.rel (0) target = $region17
  $region16: #{encoder_forward.19} parent=0 // pred_region
    _
  $region17: #{encoder_forward.19} parent=0 // pred_fallthru
    _
  // Predicated region
  $region18: #{encoder_forward.19} parent=0 // pred_check
    _
  $region19: #{encoder_forward.19} parent=0 // pred_check_branch
    %85 = sbr.rel (0) target = $region21
  $region20: #{encoder_forward.19} parent=0 // pred_region
    _
  $region21: #{encoder_forward.19} parent=0 // pred_fallthru
    _

</llo_original>
